<compile_context>
chip_gen: v5e
topology: v5e:2x2
jax: 0.10.0
libtpu: 0.0.40
codegen_flags: <defaults>
</compile_context>

<pallas_src>
import functools

import jax
import jax.numpy as jnp
from jax.experimental import pallas as pl
from jax.experimental.pallas import tpu as pltpu

EPS = 1e-5
NUM_GNN_LAYERS = 5
XIN = 128                      # lane-padded width of x for the layer-0 prime
VMEM = pl.BlockSpec(memory_space=pltpu.MemorySpace.VMEM)


# ---------------------------------------------------------------------------
# helpers
# ---------------------------------------------------------------------------
def _round_up(a, m):
    return (a + m - 1) // m * m


def _pad_to(w, rows, cols):
    return jnp.pad(w, ((0, rows - w.shape[0]), (0, cols - w.shape[1])))


def _regroup_rows(w, h_total=3):
    # rows indexed c*H + h (PyTorch NCHW flatten) -> stacked (H, C, out)
    return jnp.stack([w[h::h_total, :] for h in range(h_total)], axis=0)


def _perm_in_rows(w, h_total=3):
    # rows indexed c*H + h (PyTorch order) -> h*C + c (kernel order)
    cin, cout = w.shape
    c = cin // h_total
    return w.reshape(c, h_total, cout).transpose(1, 0, 2).reshape(cin, cout)


def _perm_out_cols(w, h_total=3):
    # cols indexed c*H + h (PyTorch order) -> h*C + c (kernel order)
    cin, cout = w.shape
    c = cout // h_total
    return w.reshape(cin, c, h_total).transpose(0, 2, 1).reshape(cin, cout)


def _vmem_budget():
    # per-generation VMEM budget: ~100 MiB on v5e/v6e (128 MiB), ~51 MiB on
    # v7x (64 MiB); conservative fallback if the query is unavailable.
    cap = 64 * 1024 * 1024
    try:
        cap = int(pltpu.get_tpu_info().vmem_capacity_bytes)
    except Exception:
        pass
    return min(int(cap * 0.8), 112 * 1024 * 1024)


def _pick_tile(n, fw, k_out, xin, budget, bpe):
    if n <= 128:
        t = _round_up(max(n, 8), 8)
        return t, t
    cap_rows = _round_up(n, 128)
    for t in (1024, 512, 256, 128):
        if t > cap_rows:
            continue
        n_pad = _round_up(n, t)
        need = (2 * n_pad * fw * bpe                    # sup ping-pong scratch
                + t * fw * 4                            # f32 accumulator
                + 2 * (n_pad * xin * bpe                # resident x
                       + xin * fw * bpe                 # W1
                       + fw * fw * bpe                  # layer weight block
                       + t * fw * bpe                   # mix block
                       + t * t * bpe                    # adjacency block
                       + t * k_out * 4))                # output block
        if need <= budget:
            return t, n_pad
    return 128, _round_up(n, 128)


# ---------------------------------------------------------------------------
# Kernel A: AE encoder/decoder + q + GNN mix slab (grid-less)
# ---------------------------------------------------------------------------
def ae_kernel(x_ref,
              w1, b1, g1, be1,
              w2, b2, g2, be2,
              w3, b3, g3, be3,
              zw, zb,
              wd1, bd1, gd1, bed1,
              wd2, bd2, gd2, bed2,
              wd3, bd3, gd3, bed3,
              wxb, bxb,
              ct,
              xbar_out, q_out, z_out, mix_out,
              *, n_rows, seg_width, v):
    H = 3
    N = n_rows
    x = x_ref[...]                                            # (N, 3) f32

    def bn_relu(t, gamma, beta):
        # training-mode BatchNorm (biased batch variance), two-pass (centered)
        inv_n = 1.0 / t.shape[0]
        mean = jnp.sum(t, axis=0, keepdims=True) * inv_n
        d = t - mean
        var = jnp.sum(d * d, axis=0, keepdims=True) * inv_n
        return jnp.maximum(d * (gamma * jax.lax.rsqrt(var + EPS)) + beta, 0.0)

    # ---- encoder on the (3N, C) spatially-stacked layout (rows h-major);
    #      BN stats are per channel over all 3N rows, one dot per stage ----
    e0 = jnp.concatenate([x[:, h:h + 1] for h in range(H)], axis=0)   # (3N, 1)
    e1 = bn_relu(e0 * w1[...] + b1[...], g1[...], be1[...])           # (3N, E1)
    e2 = bn_relu(jnp.dot(e1, w2[...], preferred_element_type=jnp.float32)
                 + b2[...], g2[...], be2[...])                        # (3N, E2)
    e3 = bn_relu(jnp.dot(e2, w3[...], preferred_element_type=jnp.float32)
                 + b3[...], g3[...], be3[...])                        # (3N, E3)

    # ---- z layer: weight rows regrouped per spatial position (trace time) ----
    z = zb[...]
    for h in range(H):
        z = z + jnp.dot(e3[h * N:(h + 1) * N, :], zw[h],
                        preferred_element_type=jnp.float32)
    z_out[...] = z

    # ---- decoder (1x1 convs on (N, n_z, 1, 1) => plain per-column BN) ----
    d1 = bn_relu(jnp.dot(z, wd1[...], preferred_element_type=jnp.float32)
                 + bd1[...], gd1[...], bed1[...])
    d2 = bn_relu(jnp.dot(d1, wd2[...], preferred_element_type=jnp.float32)
                 + bd2[...], gd2[...], bed2[...])
    d3 = bn_relu(jnp.dot(d2, wd3[...], preferred_element_type=jnp.float32)
                 + bd3[...], gd3[...], bed3[...])
    xbar_out[...] = (jnp.dot(d3, wxb[...], preferred_element_type=jnp.float32)
                     + bxb[...])

    # ---- Student-t soft assignment q (exact normalization) ----
    c = ct[...]                                               # (n_z, K)
    zz = jnp.sum(z * z, axis=1, keepdims=True)
    cc = jnp.sum(c * c, axis=0, keepdims=True)
    cross = jnp.dot(z, c, preferred_element_type=jnp.float32)
    dist2 = jnp.maximum(zz + cc - 2.0 * cross, 0.0)
    q = 1.0 / (1.0 + dist2 * (1.0 / v))
    expo = (v + 1.0) / 2.0
    if expo != 1.0:                                           # v == 1 -> skip pow
        q = q ** expo
    q_out[...] = q / jnp.sum(q, axis=1, keepdims=True)

    # ---- GNN mix slab [tra1 | tra2 | tra3 | z]: one lane-dense (seg_width)
    #      bf16 store per segment, no full-slab zero init ----
    dt = mix_out.dtype

    def write_seg(idx, parts):
        width = sum(t.shape[1] for t in parts)
        tail = seg_width - width
        if tail:
            parts = parts + [jnp.zeros((N, tail), jnp.float32)]
        seg = parts[0] if len(parts) == 1 else jnp.concatenate(parts, axis=1)
        off = idx * seg_width
        mix_out[:, off:off + seg_width] = seg.astype(dt)

    write_seg(0, [e1[h * N:(h + 1) * N, :] for h in range(H)])
    write_seg(1, [e2[h * N:(h + 1) * N, :] for h in range(H)])
    write_seg(2, [e3[h * N:(h + 1) * N, :] for h in range(H)])
    write_seg(3, [z])


# ---------------------------------------------------------------------------
# Kernel B: 5 GNN layers + softmax, grid = (layer, row_tile, col_tile)
# ---------------------------------------------------------------------------
def gnn_kernel(x_ref, w1_ref, w_ref, mix_ref, adj_ref, out_ref,
               acc_ref, sup_ref,
               *, tile, n_pad, n_layers, k_clusters):
    l = pl.program_id(0)
    i = pl.program_id(1)
    k = pl.program_id(2)
    nk = pl.num_programs(2)

    sel = jax.lax.rem(l, 2)                      # sup slot holding layer l's support
    row_k = pl.multiple_of(k * tile, tile)
    row_i = pl.multiple_of(i * tile, tile)
    cdt = adj_ref.dtype                          # matmul dtype (bf16)

    # Prime sup_0 = x @ W1 during layer 0's first row tile (one column tile
    # per step).  W1 never multiplies a hidden state (h_{-1} == 0), so there
    # is no zero-weight matmul and no hidden-state zero init.
    @pl.when(jnp.logical_and(l == 0, i == 0))
    def _():
        s0 = jnp.dot(x_ref[pl.ds(row_k, tile), :], w1_ref[...],
                     preferred_element_type=jnp.float32)
        sup_ref[pl.ds(row_k, tile), :] = s0.astype(cdt)

    # inner loop: single adjacency matmul against the precomputed support tile
    read_off = pl.multiple_of(sel * n_pad + row_k, tile)
    contrib = jnp.dot(adj_ref[...], sup_ref[pl.ds(read_off, tile), :],
                      preferred_element_type=jnp.float32)

    @pl.when(k == 0)
    def _():
        acc_ref[...] = contrib

    @pl.when(k > 0)
    def _():
        acc_ref[...] += contrib

    @pl.when(k == nk - 1)
    def _():
        res = acc_ref[...]                                    # (T, FW) f32

        @pl.when(l < n_layers - 1)
        def _():
            # h_l = relu(res); sup_{l+1} = (h_l + mix_l) @ W_{l+1}
            # computed ONCE per (layer, row tile) and stored into the other
            # half of the bf16 ping-pong scratch.
            h_new = jnp.maximum(res, 0.0)
            mixed = (h_new + mix_ref[...].astype(jnp.float32)).astype(cdt)
            sup_next = jnp.dot(mixed, w_ref[0],
                               preferred_element_type=jnp.float32)
            write_off = pl.multiple_of((1 - sel) * n_pad + row_i, tile)
            sup_ref[pl.ds(write_off, tile), :] = sup_next.astype(cdt)

        @pl.when(l == n_layers - 1)
        def _():
            logits = res[:, :k_clusters]                      # no ReLU on last layer
            m = jnp.max(logits, axis=1, keepdims=True)
            e = jnp.exp(logits - m)
            out_ref[...] = e / jnp.sum(e, axis=1, keepdims=True)
        # intermediate layers deliberately do not touch out_ref; the final
        # layer's full-block write (sequential grid) is what lands in HBM.


# ---------------------------------------------------------------------------
# parameter init (PyTorch-layout-equivalent: conv/linear weights as (in, out))
# ---------------------------------------------------------------------------
def init_params(key, n_enc_1, n_enc_2, n_enc_3, n_dec_1, n_dec_2, n_dec_3,
                n_input, n_z, n_clusters):
    assert n_input == 3, "x.view(-1, 1, 3, 1) forces n_input == 3"
    keys = jax.random.split(key, 14)

    def w(k, shape, scale=0.1):
        return scale * jax.random.normal(k, shape, dtype=jnp.float32)

    ones = lambda n: jnp.ones((1, n), jnp.float32)
    zeros = lambda n: jnp.zeros((1, n), jnp.float32)

    p = {}
    p["enc1_w"] = w(keys[0], (1, n_enc_1));        p["enc1_b"] = zeros(n_enc_1)
    p["enc1_g"] = ones(n_enc_1);                   p["enc1_be"] = zeros(n_enc_1)
    p["enc2_w"] = w(keys[1], (n_enc_1, n_enc_2));  p["enc2_b"] = zeros(n_enc_2)
    p["enc2_g"] = ones(n_enc_2);                   p["enc2_be"] = zeros(n_enc_2)
    p["enc3_w"] = w(keys[2], (n_enc_2, n_enc_3));  p["enc3_b"] = zeros(n_enc_3)
    p["enc3_g"] = ones(n_enc_3);                   p["enc3_be"] = zeros(n_enc_3)
    p["z_w"] = w(keys[3], (n_enc_3 * n_input, n_z)); p["z_b"] = zeros(n_z)
    p["dec1_w"] = w(keys[4], (n_z, n_dec_1));      p["dec1_b"] = zeros(n_dec_1)
    p["dec1_g"] = ones(n_dec_1);                   p["dec1_be"] = zeros(n_dec_1)
    p["dec2_w"] = w(keys[5], (n_dec_1, n_dec_2));  p["dec2_b"] = zeros(n_dec_2)
    p["dec2_g"] = ones(n_dec_2);                   p["dec2_be"] = zeros(n_dec_2)
    p["dec3_w"] = w(keys[6], (n_dec_2, n_dec_3));  p["dec3_b"] = zeros(n_dec_3)
    p["dec3_g"] = ones(n_dec_3);                   p["dec3_be"] = zeros(n_dec_3)
    p["xbar_w"] = w(keys[7], (n_dec_3, n_input));  p["xbar_b"] = zeros(n_input)
    p["gnn1_w"] = w(keys[8], (n_input, n_enc_1 * n_input))
    p["gnn2_w"] = w(keys[9], (n_enc_1 * n_input, n_enc_2 * n_input))
    p["gnn3_w"] = w(keys[10], (n_enc_2 * n_input, n_enc_3 * n_input))
    p["gnn4_w"] = w(keys[11], (n_enc_3 * n_input, n_z))
    p["gnn5_w"] = w(keys[12], (n_z, n_clusters))
    p["cluster"] = w(keys[13], (n_clusters, n_z), scale=1.0)
    return p


# ---------------------------------------------------------------------------
# forward
# ---------------------------------------------------------------------------
def dgclm_forward(params, x, adj, v=1.0, matmul_dtype=jnp.bfloat16):
    p = params
    N, n_in = x.shape
    H = 3
    E1 = p["enc1_w"].shape[1]
    E2 = p["enc2_w"].shape[1]
    E3 = p["enc3_w"].shape[1]
    n_z = p["z_w"].shape[1]
    K = p["gnn5_w"].shape[1]

    sup_widths = (H * E1, H * E2, H * E3, n_z, K)
    FW = _round_up(max(max(sup_widths), 128), 128)   # uniform lane-dense width

    budget = _vmem_budget()

    # fold the PyTorch NCHW .view reorder into the consuming weights (trace time)
    zw_s = _regroup_rows(p["z_w"], H)

    # ---- Kernel A: fused AE + q + mix slab ----
    x_bar, q, z, mix = pl.pallas_call(
        functools.partial(ae_kernel, n_rows=N, seg_width=FW, v=float(v)),
        out_shape=(
            jax.ShapeDtypeStruct((N, n_in), jnp.float32),
            jax.ShapeDtypeStruct((N, K), jnp.float32),
            jax.ShapeDtypeStruct((N, n_z), jnp.float32),
            jax.ShapeDtypeStruct((N, 4 * FW), matmul_dtype),
        ),
        in_specs=[VMEM] * 30,
        out_specs=(VMEM, VMEM, VMEM, VMEM),
        compiler_params=pltpu.CompilerParams(vmem_limit_bytes=budget),
    )(x,
      p["enc1_w"], p["enc1_b"], p["enc1_g"], p["enc1_be"],
      p["enc2_w"], p["enc2_b"], p["enc2_g"], p["enc2_be"],
      p["enc3_w"], p["enc3_b"], p["enc3_g"], p["enc3_be"],
      zw_s, p["z_b"],
      p["dec1_w"], p["dec1_b"], p["dec1_g"], p["dec1_be"],
      p["dec2_w"], p["dec2_b"], p["dec2_g"], p["dec2_be"],
      p["dec3_w"], p["dec3_b"], p["dec3_g"], p["dec3_be"],
      p["xbar_w"], p["xbar_b"],
      p["cluster"].T)

    # ---- Kernel B: tiled GNN stack over the dense adjacency ----
    bpe = jnp.dtype(matmul_dtype).itemsize
    T, N_pad = _pick_tile(N, FW, K, XIN, budget, bpe)
    ni = N_pad // T

    # kernel-order column permutations so the slab layout and weights agree
    w1_my = _perm_out_cols(p["gnn1_w"], H)
    w2_my = _perm_out_cols(_perm_in_rows(p["gnn2_w"], H), H)
    w3_my = _perm_out_cols(_perm_in_rows(p["gnn3_w"], H), H)
    w4_my = _perm_in_rows(p["gnn4_w"], H)
    w5_my = p["gnn5_w"]

    x_p = jnp.zeros((N_pad, XIN), matmul_dtype)
    x_p = x_p.at[:N, :n_in].set(x.astype(matmul_dtype))
    w1_p = _pad_to(w1_my, XIN, FW).astype(matmul_dtype)
    wstack = jnp.stack([                         # epilogue weight of layer l
        _pad_to(w2_my, FW, FW),
        _pad_to(w3_my, FW, FW),
        _pad_to(w4_my, FW, FW),
        _pad_to(w5_my, FW, FW),
    ]).astype(matmul_dtype)

    adj_c = adj.astype(matmul_dtype)             # bf16 adj stream, f32 accumulate
    mix_p = mix
    if N_pad != N:
        adj_c = jnp.pad(adj_c, ((0, N_pad - N), (0, N_pad - N)))
        mix_p = jnp.pad(mix, ((0, N_pad - N), (0, 0)))

    last_seg = NUM_GNN_LAYERS - 2                # 4 mix segments / 4 weights

    predict = pl.pallas_call(
        functools.partial(gnn_kernel, tile=T, n_pad=N_pad,
                          n_layers=NUM_GNN_LAYERS, k_clusters=K),
        out_shape=jax.ShapeDtypeStruct((N_pad, K), jnp.float32),
        grid_spec=pltpu.PrefetchScalarGridSpec(
            num_scalar_prefetch=0,
            grid=(NUM_GNN_LAYERS, ni, ni),
            in_specs=[
                pl.BlockSpec((N_pad, XIN), lambda l, i, k: (0, 0)),      # x (resident)
                pl.BlockSpec((XIN, FW), lambda l, i, k: (0, 0)),         # W1 (resident)
                pl.BlockSpec((1, FW, FW),
                             lambda l, i, k: (jnp.minimum(l, last_seg), 0, 0)),
                pl.BlockSpec((T, FW),
                             lambda l, i, k: (i, jnp.minimum(l, last_seg))),
                pl.BlockSpec((T, T), lambda l, i, k: (i, k)),            # adjacency
            ],
            out_specs=pl.BlockSpec((T, K), lambda l, i, k: (i, 0)),
            scratch_shapes=[
                pltpu.VMEM((T, FW), jnp.float32),            # f32 accumulator
                pltpu.VMEM((2 * N_pad, FW), matmul_dtype),   # bf16 sup ping-pong
            ],
        ),
        compiler_params=pltpu.CompilerParams(
            # The support state carried in VMEM scratch across the layer axis
            # forbids megacore "parallel" sharding of the row axis; a
            # per-layer split would enable it on v7x (see TODO at top).
            dimension_semantics=("arbitrary", "arbitrary", "arbitrary"),
            vmem_limit_bytes=budget),
    )(x_p, w1_p, wstack, mix_p, adj_c)

    if N_pad != N:
        predict = predict[:N]
    return x_bar, q, predict, z


if __name__ == "__main__":
    key = jax.random.PRNGKey(0)
    k_param, k_x, k_adj = jax.random.split(key, 3)

    N = 16
    dims = dict(n_enc_1=4, n_enc_2=8, n_enc_3=16,
                n_dec_1=16, n_dec_2=8, n_dec_3=4,
                n_input=3, n_z=8, n_clusters=4)
    params = init_params(k_param, **dims)

    x = jax.random.normal(k_x, (N, dims["n_input"]), dtype=jnp.float32)
    # dense row-normalized adjacency with self loops (GCN-style preprocessing)
    a = jnp.abs(jax.random.normal(k_adj, (N, N), dtype=jnp.float32))
    a = a + jnp.eye(N, dtype=jnp.float32)
    adj = a / jnp.sum(a, axis=1, keepdims=True)

    x_bar, q, predict, z = jax.jit(dgclm_forward)(params, x, adj)
    jax.block_until_ready((x_bar, q, predict, z))

    assert x_bar.shape == (N, dims["n_input"])
    assert q.shape == (N, dims["n_clusters"])
    assert predict.shape == (N, dims["n_clusters"])
    assert z.shape == (N, dims["n_z"])
    assert bool(jnp.isfinite(x_bar).all() & jnp.isfinite(q).all()
                & jnp.isfinite(predict).all() & jnp.isfinite(z).all())
    print("KERNEL_OK")
</pallas_src>

<mosaic_0001>
module attributes {stable_mosaic.version = 11 : i64} {
  func.func @ae_kernel(%arg0: memref<16x3xf32, #tpu.memory_space<vmem>>, %arg1: memref<1x4xf32, #tpu.memory_space<vmem>>, %arg2: memref<1x4xf32, #tpu.memory_space<vmem>>, %arg3: memref<1x4xf32, #tpu.memory_space<vmem>>, %arg4: memref<1x4xf32, #tpu.memory_space<vmem>>, %arg5: memref<4x8xf32, #tpu.memory_space<vmem>>, %arg6: memref<1x8xf32, #tpu.memory_space<vmem>>, %arg7: memref<1x8xf32, #tpu.memory_space<vmem>>, %arg8: memref<1x8xf32, #tpu.memory_space<vmem>>, %arg9: memref<8x16xf32, #tpu.memory_space<vmem>>, %arg10: memref<1x16xf32, #tpu.memory_space<vmem>>, %arg11: memref<1x16xf32, #tpu.memory_space<vmem>>, %arg12: memref<1x16xf32, #tpu.memory_space<vmem>>, %arg13: memref<3x16x8xf32, #tpu.memory_space<vmem>>, %arg14: memref<1x8xf32, #tpu.memory_space<vmem>>, %arg15: memref<8x16xf32, #tpu.memory_space<vmem>>, %arg16: memref<1x16xf32, #tpu.memory_space<vmem>>, %arg17: memref<1x16xf32, #tpu.memory_space<vmem>>, %arg18: memref<1x16xf32, #tpu.memory_space<vmem>>, %arg19: memref<16x8xf32, #tpu.memory_space<vmem>>, %arg20: memref<1x8xf32, #tpu.memory_space<vmem>>, %arg21: memref<1x8xf32, #tpu.memory_space<vmem>>, %arg22: memref<1x8xf32, #tpu.memory_space<vmem>>, %arg23: memref<8x4xf32, #tpu.memory_space<vmem>>, %arg24: memref<1x4xf32, #tpu.memory_space<vmem>>, %arg25: memref<1x4xf32, #tpu.memory_space<vmem>>, %arg26: memref<1x4xf32, #tpu.memory_space<vmem>>, %arg27: memref<4x3xf32, #tpu.memory_space<vmem>>, %arg28: memref<1x3xf32, #tpu.memory_space<vmem>>, %arg29: memref<8x4xf32, #tpu.memory_space<vmem>>, %arg30: memref<16x3xf32, #tpu.memory_space<vmem>>, %arg31: memref<16x4xf32, #tpu.memory_space<vmem>>, %arg32: memref<16x8xf32, #tpu.memory_space<vmem>>, %arg33: memref<16x512xbf16, #tpu.memory_space<vmem>>) attributes {dimension_semantics = [], scalar_prefetch = 0 : i64, scratch_operands = 0 : i64, tpu.core_type = #tpu.core_type<tc>} {
    %c0 = arith.constant 0 : index
    %c0_0 = arith.constant 0 : index
    %0 = vector.load %arg0[%c0, %c0_0] : memref<16x3xf32, #tpu.memory_space<vmem>>, vector<16x3xf32>
    %1 = vector.extract_strided_slice %0 {offsets = [0, 0], sizes = [16, 1], strides = [1, 1]} : vector<16x3xf32> to vector<16x1xf32>
    %2 = vector.extract_strided_slice %0 {offsets = [0, 1], sizes = [16, 1], strides = [1, 1]} : vector<16x3xf32> to vector<16x1xf32>
    %3 = vector.extract_strided_slice %0 {offsets = [0, 2], sizes = [16, 1], strides = [1, 1]} : vector<16x3xf32> to vector<16x1xf32>
    %4 = tpu.concatenate %1, %2, %3 in 0 : vector<16x1xf32>, vector<16x1xf32>, vector<16x1xf32> -> vector<48x1xf32>
    %c0_1 = arith.constant 0 : index
    %c0_2 = arith.constant 0 : index
    %5 = vector.load %arg1[%c0_1, %c0_2] : memref<1x4xf32, #tpu.memory_space<vmem>>, vector<1x4xf32>
    %6 = vector.broadcast %4 : vector<48x1xf32> to vector<48x4xf32>
    %7 = vector.broadcast %5 : vector<1x4xf32> to vector<48x4xf32>
    %8 = arith.mulf %6, %7 : vector<48x4xf32>
    %c0_3 = arith.constant 0 : index
    %c0_4 = arith.constant 0 : index
    %9 = vector.load %arg2[%c0_3, %c0_4] : memref<1x4xf32, #tpu.memory_space<vmem>>, vector<1x4xf32>
    %10 = vector.broadcast %9 : vector<1x4xf32> to vector<48x4xf32>
    %11 = arith.addf %8, %10 : vector<48x4xf32>
    %c0_5 = arith.constant 0 : index
    %c0_6 = arith.constant 0 : index
    %12 = vector.load %arg3[%c0_5, %c0_6] : memref<1x4xf32, #tpu.memory_space<vmem>>, vector<1x4xf32>
    %c0_7 = arith.constant 0 : index
    %c0_8 = arith.constant 0 : index
    %13 = vector.load %arg4[%c0_7, %c0_8] : memref<1x4xf32, #tpu.memory_space<vmem>>, vector<1x4xf32>
    %cst = arith.constant dense<0.000000e+00> : vector<4xf32>
    %14 = vector.multi_reduction <add>, %11, %cst [0] : vector<48x4xf32> to vector<4xf32>
    %15 = vector.shape_cast %14 : vector<4xf32> to vector<1x4xf32>
    %cst_9 = arith.constant 0.020833334 : f32
    %16 = vector.broadcast %cst_9 : f32 to vector<1x4xf32>
    %17 = arith.mulf %15, %16 : vector<1x4xf32>
    %18 = vector.broadcast %17 : vector<1x4xf32> to vector<48x4xf32>
    %19 = arith.subf %11, %18 : vector<48x4xf32>
    %20 = arith.mulf %19, %19 : vector<48x4xf32>
    %cst_10 = arith.constant dense<0.000000e+00> : vector<4xf32>
    %21 = vector.multi_reduction <add>, %20, %cst_10 [0] : vector<48x4xf32> to vector<4xf32>
    %22 = vector.shape_cast %21 : vector<4xf32> to vector<1x4xf32>
    %cst_11 = arith.constant 0.020833334 : f32
    %23 = vector.broadcast %cst_11 : f32 to vector<1x4xf32>
    %24 = arith.mulf %22, %23 : vector<1x4xf32>
    %cst_12 = arith.constant 9.99999974E-6 : f32
    %25 = vector.broadcast %cst_12 : f32 to vector<1x4xf32>
    %26 = arith.addf %24, %25 : vector<1x4xf32>
    %27 = math.rsqrt %26 : vector<1x4xf32>
    %28 = arith.mulf %12, %27 : vector<1x4xf32>
    %29 = vector.broadcast %28 : vector<1x4xf32> to vector<48x4xf32>
    %30 = arith.mulf %19, %29 : vector<48x4xf32>
    %31 = vector.broadcast %13 : vector<1x4xf32> to vector<48x4xf32>
    %32 = arith.addf %30, %31 : vector<48x4xf32>
    %cst_13 = arith.constant 0.000000e+00 : f32
    %33 = vector.broadcast %cst_13 : f32 to vector<48x4xf32>
    %34 = arith.maximumf %32, %33 : vector<48x4xf32>
    %c0_14 = arith.constant 0 : index
    %c0_15 = arith.constant 0 : index
    %35 = vector.load %arg5[%c0_14, %c0_15] : memref<4x8xf32, #tpu.memory_space<vmem>>, vector<4x8xf32>
    %cst_16 = arith.constant dense<0.000000e+00> : vector<48x8xf32>
    %36 = tpu.matmul %34, %35, %cst_16 {dimension_numbers = #tpu.dot_dimension_numbers<[1], [0], [0], [1], [0, 0, 1, 1], [], []>} : vector<48x4xf32>, vector<4x8xf32>, vector<48x8xf32> -> vector<48x8xf32>
    %c0_17 = arith.constant 0 : index
    %c0_18 = arith.constant 0 : index
    %37 = vector.load %arg6[%c0_17, %c0_18] : memref<1x8xf32, #tpu.memory_space<vmem>>, vector<1x8xf32>
    %38 = vector.broadcast %37 : vector<1x8xf32> to vector<48x8xf32>
    %39 = arith.addf %36, %38 : vector<48x8xf32>
    %c0_19 = arith.constant 0 : index
    %c0_20 = arith.constant 0 : index
    %40 = vector.load %arg7[%c0_19, %c0_20] : memref<1x8xf32, #tpu.memory_space<vmem>>, vector<1x8xf32>
    %c0_21 = arith.constant 0 : index
    %c0_22 = arith.constant 0 : index
    %41 = vector.load %arg8[%c0_21, %c0_22] : memref<1x8xf32, #tpu.memory_space<vmem>>, vector<1x8xf32>
    %cst_23 = arith.constant dense<0.000000e+00> : vector<8xf32>
    %42 = vector.multi_reduction <add>, %39, %cst_23 [0] : vector<48x8xf32> to vector<8xf32>
    %43 = vector.shape_cast %42 : vector<8xf32> to vector<1x8xf32>
    %cst_24 = arith.constant 0.020833334 : f32
    %44 = vector.broadcast %cst_24 : f32 to vector<1x8xf32>
    %45 = arith.mulf %43, %44 : vector<1x8xf32>
    %46 = vector.broadcast %45 : vector<1x8xf32> to vector<48x8xf32>
    %47 = arith.subf %39, %46 : vector<48x8xf32>
    %48 = arith.mulf %47, %47 : vector<48x8xf32>
    %cst_25 = arith.constant dense<0.000000e+00> : vector<8xf32>
    %49 = vector.multi_reduction <add>, %48, %cst_25 [0] : vector<48x8xf32> to vector<8xf32>
    %50 = vector.shape_cast %49 : vector<8xf32> to vector<1x8xf32>
    %cst_26 = arith.constant 0.020833334 : f32
    %51 = vector.broadcast %cst_26 : f32 to vector<1x8xf32>
    %52 = arith.mulf %50, %51 : vector<1x8xf32>
    %cst_27 = arith.constant 9.99999974E-6 : f32
    %53 = vector.broadcast %cst_27 : f32 to vector<1x8xf32>
    %54 = arith.addf %52, %53 : vector<1x8xf32>
    %55 = math.rsqrt %54 : vector<1x8xf32>
    %56 = arith.mulf %40, %55 : vector<1x8xf32>
    %57 = vector.broadcast %56 : vector<1x8xf32> to vector<48x8xf32>
    %58 = arith.mulf %47, %57 : vector<48x8xf32>
    %59 = vector.broadcast %41 : vector<1x8xf32> to vector<48x8xf32>
    %60 = arith.addf %58, %59 : vector<48x8xf32>
    %cst_28 = arith.constant 0.000000e+00 : f32
    %61 = vector.broadcast %cst_28 : f32 to vector<48x8xf32>
    %62 = arith.maximumf %60, %61 : vector<48x8xf32>
    %c0_29 = arith.constant 0 : index
    %c0_30 = arith.constant 0 : index
    %63 = vector.load %arg9[%c0_29, %c0_30] : memref<8x16xf32, #tpu.memory_space<vmem>>, vector<8x16xf32>
    %cst_31 = arith.constant dense<0.000000e+00> : vector<48x16xf32>
    %64 = tpu.matmul %62, %63, %cst_31 {dimension_numbers = #tpu.dot_dimension_numbers<[1], [0], [0], [1], [0, 0, 1, 1], [], []>} : vector<48x8xf32>, vector<8x16xf32>, vector<48x16xf32> -> vector<48x16xf32>
    %c0_32 = arith.constant 0 : index
    %c0_33 = arith.constant 0 : index
    %65 = vector.load %arg10[%c0_32, %c0_33] : memref<1x16xf32, #tpu.memory_space<vmem>>, vector<1x16xf32>
    %66 = vector.broadcast %65 : vector<1x16xf32> to vector<48x16xf32>
    %67 = arith.addf %64, %66 : vector<48x16xf32>
    %c0_34 = arith.constant 0 : index
    %c0_35 = arith.constant 0 : index
    %68 = vector.load %arg11[%c0_34, %c0_35] : memref<1x16xf32, #tpu.memory_space<vmem>>, vector<1x16xf32>
    %c0_36 = arith.constant 0 : index
    %c0_37 = arith.constant 0 : index
    %69 = vector.load %arg12[%c0_36, %c0_37] : memref<1x16xf32, #tpu.memory_space<vmem>>, vector<1x16xf32>
    %cst_38 = arith.constant dense<0.000000e+00> : vector<16xf32>
    %70 = vector.multi_reduction <add>, %67, %cst_38 [0] : vector<48x16xf32> to vector<16xf32>
    %71 = vector.shape_cast %70 : vector<16xf32> to vector<1x16xf32>
    %cst_39 = arith.constant 0.020833334 : f32
    %72 = vector.broadcast %cst_39 : f32 to vector<1x16xf32>
    %73 = arith.mulf %71, %72 : vector<1x16xf32>
    %74 = vector.broadcast %73 : vector<1x16xf32> to vector<48x16xf32>
    %75 = arith.subf %67, %74 : vector<48x16xf32>
    %76 = arith.mulf %75, %75 : vector<48x16xf32>
    %cst_40 = arith.constant dense<0.000000e+00> : vector<16xf32>
    %77 = vector.multi_reduction <add>, %76, %cst_40 [0] : vector<48x16xf32> to vector<16xf32>
    %78 = vector.shape_cast %77 : vector<16xf32> to vector<1x16xf32>
    %cst_41 = arith.constant 0.020833334 : f32
    %79 = vector.broadcast %cst_41 : f32 to vector<1x16xf32>
    %80 = arith.mulf %78, %79 : vector<1x16xf32>
    %cst_42 = arith.constant 9.99999974E-6 : f32
    %81 = vector.broadcast %cst_42 : f32 to vector<1x16xf32>
    %82 = arith.addf %80, %81 : vector<1x16xf32>
    %83 = math.rsqrt %82 : vector<1x16xf32>
    %84 = arith.mulf %68, %83 : vector<1x16xf32>
    %85 = vector.broadcast %84 : vector<1x16xf32> to vector<48x16xf32>
    %86 = arith.mulf %75, %85 : vector<48x16xf32>
    %87 = vector.broadcast %69 : vector<1x16xf32> to vector<48x16xf32>
    %88 = arith.addf %86, %87 : vector<48x16xf32>
    %cst_43 = arith.constant 0.000000e+00 : f32
    %89 = vector.broadcast %cst_43 : f32 to vector<48x16xf32>
    %90 = arith.maximumf %88, %89 : vector<48x16xf32>
    %c0_44 = arith.constant 0 : index
    %c0_45 = arith.constant 0 : index
    %91 = vector.load %arg14[%c0_44, %c0_45] : memref<1x8xf32, #tpu.memory_space<vmem>>, vector<1x8xf32>
    %92 = vector.extract_strided_slice %90 {offsets = [0, 0], sizes = [16, 16], strides = [1, 1]} : vector<48x16xf32> to vector<16x16xf32>
    %c0_46 = arith.constant 0 : index
    %c0_47 = arith.constant 0 : index
    %c0_48 = arith.constant 0 : index
    %93 = vector.load %arg13[%c0_46, %c0_47, %c0_48] : memref<3x16x8xf32, #tpu.memory_space<vmem>>, vector<1x16x8xf32>
    %94 = vector.shape_cast %93 : vector<1x16x8xf32> to vector<16x8xf32>
    %cst_49 = arith.constant dense<0.000000e+00> : vector<16x8xf32>
    %95 = tpu.matmul %92, %94, %cst_49 {dimension_numbers = #tpu.dot_dimension_numbers<[1], [0], [0], [1], [0, 0, 1, 1], [], []>} : vector<16x16xf32>, vector<16x8xf32>, vector<16x8xf32> -> vector<16x8xf32>
    %96 = vector.broadcast %91 : vector<1x8xf32> to vector<16x8xf32>
    %97 = arith.addf %96, %95 : vector<16x8xf32>
    %98 = vector.extract_strided_slice %90 {offsets = [16, 0], sizes = [16, 16], strides = [1, 1]} : vector<48x16xf32> to vector<16x16xf32>
    %c1 = arith.constant 1 : index
    %c0_50 = arith.constant 0 : index
    %c0_51 = arith.constant 0 : index
    %99 = vector.load %arg13[%c1, %c0_50, %c0_51] : memref<3x16x8xf32, #tpu.memory_space<vmem>>, vector<1x16x8xf32>
    %100 = vector.shape_cast %99 : vector<1x16x8xf32> to vector<16x8xf32>
    %cst_52 = arith.constant dense<0.000000e+00> : vector<16x8xf32>
    %101 = tpu.matmul %98, %100, %cst_52 {dimension_numbers = #tpu.dot_dimension_numbers<[1], [0], [0], [1], [0, 0, 1, 1], [], []>} : vector<16x16xf32>, vector<16x8xf32>, vector<16x8xf32> -> vector<16x8xf32>
    %102 = arith.addf %97, %101 : vector<16x8xf32>
    %103 = vector.extract_strided_slice %90 {offsets = [32, 0], sizes = [16, 16], strides = [1, 1]} : vector<48x16xf32> to vector<16x16xf32>
    %c2 = arith.constant 2 : index
    %c0_53 = arith.constant 0 : index
    %c0_54 = arith.constant 0 : index
    %104 = vector.load %arg13[%c2, %c0_53, %c0_54] : memref<3x16x8xf32, #tpu.memory_space<vmem>>, vector<1x16x8xf32>
    %105 = vector.shape_cast %104 : vector<1x16x8xf32> to vector<16x8xf32>
    %cst_55 = arith.constant dense<0.000000e+00> : vector<16x8xf32>
    %106 = tpu.matmul %103, %105, %cst_55 {dimension_numbers = #tpu.dot_dimension_numbers<[1], [0], [0], [1], [0, 0, 1, 1], [], []>} : vector<16x16xf32>, vector<16x8xf32>, vector<16x8xf32> -> vector<16x8xf32>
    %107 = arith.addf %102, %106 : vector<16x8xf32>
    %c0_56 = arith.constant 0 : index
    %c0_57 = arith.constant 0 : index
    %108 = vector.load %arg32[%c0_56, %c0_57] : memref<16x8xf32, #tpu.memory_space<vmem>>, vector<16x8xf32>
    tpu.vector_store %arg32[%c0_56, %c0_57], %107 {strides = array<i32>} : memref<16x8xf32, #tpu.memory_space<vmem>>, vector<16x8xf32>,
    %c0_58 = arith.constant 0 : index
    %c0_59 = arith.constant 0 : index
    %109 = vector.load %arg15[%c0_58, %c0_59] : memref<8x16xf32, #tpu.memory_space<vmem>>, vector<8x16xf32>
    %cst_60 = arith.constant dense<0.000000e+00> : vector<16x16xf32>
    %110 = tpu.matmul %107, %109, %cst_60 {dimension_numbers = #tpu.dot_dimension_numbers<[1], [0], [0], [1], [0, 0, 1, 1], [], []>} : vector<16x8xf32>, vector<8x16xf32>, vector<16x16xf32> -> vector<16x16xf32>
    %c0_61 = arith.constant 0 : index
    %c0_62 = arith.constant 0 : index
    %111 = vector.load %arg16[%c0_61, %c0_62] : memref<1x16xf32, #tpu.memory_space<vmem>>, vector<1x16xf32>
    %112 = vector.broadcast %111 : vector<1x16xf32> to vector<16x16xf32>
    %113 = arith.addf %110, %112 : vector<16x16xf32>
    %c0_63 = arith.constant 0 : index
    %c0_64 = arith.constant 0 : index
    %114 = vector.load %arg17[%c0_63, %c0_64] : memref<1x16xf32, #tpu.memory_space<vmem>>, vector<1x16xf32>
    %c0_65 = arith.constant 0 : index
    %c0_66 = arith.constant 0 : index
    %115 = vector.load %arg18[%c0_65, %c0_66] : memref<1x16xf32, #tpu.memory_space<vmem>>, vector<1x16xf32>
    %cst_67 = arith.constant dense<0.000000e+00> : vector<16xf32>
    %116 = vector.multi_reduction <add>, %113, %cst_67 [0] : vector<16x16xf32> to vector<16xf32>
    %117 = vector.shape_cast %116 : vector<16xf32> to vector<1x16xf32>
    %cst_68 = arith.constant 6.250000e-02 : f32
    %118 = vector.broadcast %cst_68 : f32 to vector<1x16xf32>
    %119 = arith.mulf %117, %118 : vector<1x16xf32>
    %120 = vector.broadcast %119 : vector<1x16xf32> to vector<16x16xf32>
    %121 = arith.subf %113, %120 : vector<16x16xf32>
    %122 = arith.mulf %121, %121 : vector<16x16xf32>
    %cst_69 = arith.constant dense<0.000000e+00> : vector<16xf32>
    %123 = vector.multi_reduction <add>, %122, %cst_69 [0] : vector<16x16xf32> to vector<16xf32>
    %124 = vector.shape_cast %123 : vector<16xf32> to vector<1x16xf32>
    %cst_70 = arith.constant 6.250000e-02 : f32
    %125 = vector.broadcast %cst_70 : f32 to vector<1x16xf32>
    %126 = arith.mulf %124, %125 : vector<1x16xf32>
    %cst_71 = arith.constant 9.99999974E-6 : f32
    %127 = vector.broadcast %cst_71 : f32 to vector<1x16xf32>
    %128 = arith.addf %126, %127 : vector<1x16xf32>
    %129 = math.rsqrt %128 : vector<1x16xf32>
    %130 = arith.mulf %114, %129 : vector<1x16xf32>
    %131 = vector.broadcast %130 : vector<1x16xf32> to vector<16x16xf32>
    %132 = arith.mulf %121, %131 : vector<16x16xf32>
    %133 = vector.broadcast %115 : vector<1x16xf32> to vector<16x16xf32>
    %134 = arith.addf %132, %133 : vector<16x16xf32>
    %cst_72 = arith.constant 0.000000e+00 : f32
    %135 = vector.broadcast %cst_72 : f32 to vector<16x16xf32>
    %136 = arith.maximumf %134, %135 : vector<16x16xf32>
    %c0_73 = arith.constant 0 : index
    %c0_74 = arith.constant 0 : index
    %137 = vector.load %arg19[%c0_73, %c0_74] : memref<16x8xf32, #tpu.memory_space<vmem>>, vector<16x8xf32>
    %cst_75 = arith.constant dense<0.000000e+00> : vector<16x8xf32>
    %138 = tpu.matmul %136, %137, %cst_75 {dimension_numbers = #tpu.dot_dimension_numbers<[1], [0], [0], [1], [0, 0, 1, 1], [], []>} : vector<16x16xf32>, vector<16x8xf32>, vector<16x8xf32> -> vector<16x8xf32>
    %c0_76 = arith.constant 0 : index
    %c0_77 = arith.constant 0 : index
    %139 = vector.load %arg20[%c0_76, %c0_77] : memref<1x8xf32, #tpu.memory_space<vmem>>, vector<1x8xf32>
    %140 = vector.broadcast %139 : vector<1x8xf32> to vector<16x8xf32>
    %141 = arith.addf %138, %140 : vector<16x8xf32>
    %c0_78 = arith.constant 0 : index
    %c0_79 = arith.constant 0 : index
    %142 = vector.load %arg21[%c0_78, %c0_79] : memref<1x8xf32, #tpu.memory_space<vmem>>, vector<1x8xf32>
    %c0_80 = arith.constant 0 : index
    %c0_81 = arith.constant 0 : index
    %143 = vector.load %arg22[%c0_80, %c0_81] : memref<1x8xf32, #tpu.memory_space<vmem>>, vector<1x8xf32>
    %cst_82 = arith.constant dense<0.000000e+00> : vector<8xf32>
    %144 = vector.multi_reduction <add>, %141, %cst_82 [0] : vector<16x8xf32> to vector<8xf32>
    %145 = vector.shape_cast %144 : vector<8xf32> to vector<1x8xf32>
    %cst_83 = arith.constant 6.250000e-02 : f32
    %146 = vector.broadcast %cst_83 : f32 to vector<1x8xf32>
    %147 = arith.mulf %145, %146 : vector<1x8xf32>
    %148 = vector.broadcast %147 : vector<1x8xf32> to vector<16x8xf32>
    %149 = arith.subf %141, %148 : vector<16x8xf32>
    %150 = arith.mulf %149, %149 : vector<16x8xf32>
    %cst_84 = arith.constant dense<0.000000e+00> : vector<8xf32>
    %151 = vector.multi_reduction <add>, %150, %cst_84 [0] : vector<16x8xf32> to vector<8xf32>
    %152 = vector.shape_cast %151 : vector<8xf32> to vector<1x8xf32>
    %cst_85 = arith.constant 6.250000e-02 : f32
    %153 = vector.broadcast %cst_85 : f32 to vector<1x8xf32>
    %154 = arith.mulf %152, %153 : vector<1x8xf32>
    %cst_86 = arith.constant 9.99999974E-6 : f32
    %155 = vector.broadcast %cst_86 : f32 to vector<1x8xf32>
    %156 = arith.addf %154, %155 : vector<1x8xf32>
    %157 = math.rsqrt %156 : vector<1x8xf32>
    %158 = arith.mulf %142, %157 : vector<1x8xf32>
    %159 = vector.broadcast %158 : vector<1x8xf32> to vector<16x8xf32>
    %160 = arith.mulf %149, %159 : vector<16x8xf32>
    %161 = vector.broadcast %143 : vector<1x8xf32> to vector<16x8xf32>
    %162 = arith.addf %160, %161 : vector<16x8xf32>
    %cst_87 = arith.constant 0.000000e+00 : f32
    %163 = vector.broadcast %cst_87 : f32 to vector<16x8xf32>
    %164 = arith.maximumf %162, %163 : vector<16x8xf32>
    %c0_88 = arith.constant 0 : index
    %c0_89 = arith.constant 0 : index
    %165 = vector.load %arg23[%c0_88, %c0_89] : memref<8x4xf32, #tpu.memory_space<vmem>>, vector<8x4xf32>
    %cst_90 = arith.constant dense<0.000000e+00> : vector<16x4xf32>
    %166 = tpu.matmul %164, %165, %cst_90 {dimension_numbers = #tpu.dot_dimension_numbers<[1], [0], [0], [1], [0, 0, 1, 1], [], []>} : vector<16x8xf32>, vector<8x4xf32>, vector<16x4xf32> -> vector<16x4xf32>
    %c0_91 = arith.constant 0 : index
    %c0_92 = arith.constant 0 : index
    %167 = vector.load %arg24[%c0_91, %c0_92] : memref<1x4xf32, #tpu.memory_space<vmem>>, vector<1x4xf32>
    %168 = vector.broadcast %167 : vector<1x4xf32> to vector<16x4xf32>
    %169 = arith.addf %166, %168 : vector<16x4xf32>
    %c0_93 = arith.constant 0 : index
    %c0_94 = arith.constant 0 : index
    %170 = vector.load %arg25[%c0_93, %c0_94] : memref<1x4xf32, #tpu.memory_space<vmem>>, vector<1x4xf32>
    %c0_95 = arith.constant 0 : index
    %c0_96 = arith.constant 0 : index
    %171 = vector.load %arg26[%c0_95, %c0_96] : memref<1x4xf32, #tpu.memory_space<vmem>>, vector<1x4xf32>
    %cst_97 = arith.constant dense<0.000000e+00> : vector<4xf32>
    %172 = vector.multi_reduction <add>, %169, %cst_97 [0] : vector<16x4xf32> to vector<4xf32>
    %173 = vector.shape_cast %172 : vector<4xf32> to vector<1x4xf32>
    %cst_98 = arith.constant 6.250000e-02 : f32
    %174 = vector.broadcast %cst_98 : f32 to vector<1x4xf32>
    %175 = arith.mulf %173, %174 : vector<1x4xf32>
    %176 = vector.broadcast %175 : vector<1x4xf32> to vector<16x4xf32>
    %177 = arith.subf %169, %176 : vector<16x4xf32>
    %178 = arith.mulf %177, %177 : vector<16x4xf32>
    %cst_99 = arith.constant dense<0.000000e+00> : vector<4xf32>
    %179 = vector.multi_reduction <add>, %178, %cst_99 [0] : vector<16x4xf32> to vector<4xf32>
    %180 = vector.shape_cast %179 : vector<4xf32> to vector<1x4xf32>
    %cst_100 = arith.constant 6.250000e-02 : f32
    %181 = vector.broadcast %cst_100 : f32 to vector<1x4xf32>
    %182 = arith.mulf %180, %181 : vector<1x4xf32>
    %cst_101 = arith.constant 9.99999974E-6 : f32
    %183 = vector.broadcast %cst_101 : f32 to vector<1x4xf32>
    %184 = arith.addf %182, %183 : vector<1x4xf32>
    %185 = math.rsqrt %184 : vector<1x4xf32>
    %186 = arith.mulf %170, %185 : vector<1x4xf32>
    %187 = vector.broadcast %186 : vector<1x4xf32> to vector<16x4xf32>
    %188 = arith.mulf %177, %187 : vector<16x4xf32>
    %189 = vector.broadcast %171 : vector<1x4xf32> to vector<16x4xf32>
    %190 = arith.addf %188, %189 : vector<16x4xf32>
    %cst_102 = arith.constant 0.000000e+00 : f32
    %191 = vector.broadcast %cst_102 : f32 to vector<16x4xf32>
    %192 = arith.maximumf %190, %191 : vector<16x4xf32>
    %c0_103 = arith.constant 0 : index
    %c0_104 = arith.constant 0 : index
    %193 = vector.load %arg27[%c0_103, %c0_104] : memref<4x3xf32, #tpu.memory_space<vmem>>, vector<4x3xf32>
    %cst_105 = arith.constant dense<0.000000e+00> : vector<16x3xf32>
    %194 = tpu.matmul %192, %193, %cst_105 {dimension_numbers = #tpu.dot_dimension_numbers<[1], [0], [0], [1], [0, 0, 1, 1], [], []>} : vector<16x4xf32>, vector<4x3xf32>, vector<16x3xf32> -> vector<16x3xf32>
    %c0_106 = arith.constant 0 : index
    %c0_107 = arith.constant 0 : index
    %195 = vector.load %arg28[%c0_106, %c0_107] : memref<1x3xf32, #tpu.memory_space<vmem>>, vector<1x3xf32>
    %196 = vector.broadcast %195 : vector<1x3xf32> to vector<16x3xf32>
    %197 = arith.addf %194, %196 : vector<16x3xf32>
    %c0_108 = arith.constant 0 : index
    %c0_109 = arith.constant 0 : index
    %198 = vector.load %arg30[%c0_108, %c0_109] : memref<16x3xf32, #tpu.memory_space<vmem>>, vector<16x3xf32>
    tpu.vector_store %arg30[%c0_108, %c0_109], %197 {strides = array<i32>} : memref<16x3xf32, #tpu.memory_space<vmem>>, vector<16x3xf32>,
    %c0_110 = arith.constant 0 : index
    %c0_111 = arith.constant 0 : index
    %199 = vector.load %arg29[%c0_110, %c0_111] : memref<8x4xf32, #tpu.memory_space<vmem>>, vector<8x4xf32>
    %200 = arith.mulf %107, %107 : vector<16x8xf32>
    %cst_112 = arith.constant dense<0.000000e+00> : vector<16xf32>
    %201 = vector.multi_reduction <add>, %200, %cst_112 [1] : vector<16x8xf32> to vector<16xf32>
    %202 = vector.shape_cast %201 : vector<16xf32> to vector<16x1xf32>
    %203 = arith.mulf %199, %199 : vector<8x4xf32>
    %cst_113 = arith.constant dense<0.000000e+00> : vector<4xf32>
    %204 = vector.multi_reduction <add>, %203, %cst_113 [0] : vector<8x4xf32> to vector<4xf32>
    %205 = vector.shape_cast %204 : vector<4xf32> to vector<1x4xf32>
    %cst_114 = arith.constant dense<0.000000e+00> : vector<16x4xf32>
    %206 = tpu.matmul %107, %199, %cst_114 {dimension_numbers = #tpu.dot_dimension_numbers<[1], [0], [0], [1], [0, 0, 1, 1], [], []>} : vector<16x8xf32>, vector<8x4xf32>, vector<16x4xf32> -> vector<16x4xf32>
    %207 = vector.broadcast %202 : vector<16x1xf32> to vector<16x4xf32>
    %208 = vector.broadcast %205 : vector<1x4xf32> to vector<16x4xf32>
    %209 = arith.addf %207, %208 : vector<16x4xf32>
    %cst_115 = arith.constant 2.000000e+00 : f32
    %210 = vector.broadcast %cst_115 : f32 to vector<16x4xf32>
    %211 = arith.mulf %210, %206 : vector<16x4xf32>
    %212 = arith.subf %209, %211 : vector<16x4xf32>
    %cst_116 = arith.constant 0.000000e+00 : f32
    %213 = vector.broadcast %cst_116 : f32 to vector<16x4xf32>
    %214 = arith.maximumf %212, %213 : vector<16x4xf32>
    %cst_117 = arith.constant 1.000000e+00 : f32
    %215 = vector.broadcast %cst_117 : f32 to vector<16x4xf32>
    %216 = arith.mulf %214, %215 : vector<16x4xf32>
    %cst_118 = arith.constant 1.000000e+00 : f32
    %217 = vector.broadcast %cst_118 : f32 to vector<16x4xf32>
    %218 = arith.addf %217, %216 : vector<16x4xf32>
    %cst_119 = arith.constant 1.000000e+00 : f32
    %219 = vector.broadcast %cst_119 : f32 to vector<16x4xf32>
    %220 = arith.divf %219, %218 : vector<16x4xf32>
    %cst_120 = arith.constant dense<0.000000e+00> : vector<16xf32>
    %221 = vector.multi_reduction <add>, %220, %cst_120 [1] : vector<16x4xf32> to vector<16xf32>
    %222 = vector.shape_cast %221 : vector<16xf32> to vector<16x1xf32>
    %223 = vector.broadcast %222 : vector<16x1xf32> to vector<16x4xf32>
    %224 = arith.divf %220, %223 : vector<16x4xf32>
    %c0_121 = arith.constant 0 : index
    %c0_122 = arith.constant 0 : index
    %225 = vector.load %arg31[%c0_121, %c0_122] : memref<16x4xf32, #tpu.memory_space<vmem>>, vector<16x4xf32>
    tpu.vector_store %arg31[%c0_121, %c0_122], %224 {strides = array<i32>} : memref<16x4xf32, #tpu.memory_space<vmem>>, vector<16x4xf32>,
    %226 = vector.extract_strided_slice %34 {offsets = [0, 0], sizes = [16, 4], strides = [1, 1]} : vector<48x4xf32> to vector<16x4xf32>
    %227 = vector.extract_strided_slice %34 {offsets = [16, 0], sizes = [16, 4], strides = [1, 1]} : vector<48x4xf32> to vector<16x4xf32>
    %228 = vector.extract_strided_slice %34 {offsets = [32, 0], sizes = [16, 4], strides = [1, 1]} : vector<48x4xf32> to vector<16x4xf32>
    %cst_123 = arith.constant 0.000000e+00 : f32
    %229 = vector.broadcast %cst_123 : f32 to vector<16x116xf32>
    %230 = tpu.concatenate %226, %227, %228, %229 in 1 : vector<16x4xf32>, vector<16x4xf32>, vector<16x4xf32>, vector<16x116xf32> -> vector<16x128xf32>
    %231 = arith.truncf %230 : vector<16x128xf32> to vector<16x128xbf16>
    %c0_124 = arith.constant 0 : index
    %c0_125 = arith.constant 0 : index
    %232 = vector.load %arg33[%c0_124, %c0_125] : memref<16x512xbf16, #tpu.memory_space<vmem>>, vector<16x128xbf16>
    tpu.vector_store %arg33[%c0_124, %c0_125], %231 {strides = array<i32>} : memref<16x512xbf16, #tpu.memory_space<vmem>>, vector<16x128xbf16>,
    %233 = vector.extract_strided_slice %62 {offsets = [0, 0], sizes = [16, 8], strides = [1, 1]} : vector<48x8xf32> to vector<16x8xf32>
    %234 = vector.extract_strided_slice %62 {offsets = [16, 0], sizes = [16, 8], strides = [1, 1]} : vector<48x8xf32> to vector<16x8xf32>
    %235 = vector.extract_strided_slice %62 {offsets = [32, 0], sizes = [16, 8], strides = [1, 1]} : vector<48x8xf32> to vector<16x8xf32>
    %cst_126 = arith.constant 0.000000e+00 : f32
    %236 = vector.broadcast %cst_126 : f32 to vector<16x104xf32>
    %237 = tpu.concatenate %233, %234, %235, %236 in 1 : vector<16x8xf32>, vector<16x8xf32>, vector<16x8xf32>, vector<16x104xf32> -> vector<16x128xf32>
    %238 = arith.truncf %237 : vector<16x128xf32> to vector<16x128xbf16>
    %c0_127 = arith.constant 0 : index
    %c128 = arith.constant 128 : index
    %239 = vector.load %arg33[%c0_127, %c128] : memref<16x512xbf16, #tpu.memory_space<vmem>>, vector<16x128xbf16>
    tpu.vector_store %arg33[%c0_127, %c128], %238 {strides = array<i32>} : memref<16x512xbf16, #tpu.memory_space<vmem>>, vector<16x128xbf16>,
    %240 = vector.extract_strided_slice %90 {offsets = [0, 0], sizes = [16, 16], strides = [1, 1]} : vector<48x16xf32> to vector<16x16xf32>
    %241 = vector.extract_strided_slice %90 {offsets = [16, 0], sizes = [16, 16], strides = [1, 1]} : vector<48x16xf32> to vector<16x16xf32>
    %242 = vector.extract_strided_slice %90 {offsets = [32, 0], sizes = [16, 16], strides = [1, 1]} : vector<48x16xf32> to vector<16x16xf32>
    %cst_128 = arith.constant 0.000000e+00 : f32
    %243 = vector.broadcast %cst_128 : f32 to vector<16x80xf32>
    %244 = tpu.concatenate %240, %241, %242, %243 in 1 : vector<16x16xf32>, vector<16x16xf32>, vector<16x16xf32>, vector<16x80xf32> -> vector<16x128xf32>
    %245 = arith.truncf %244 : vector<16x128xf32> to vector<16x128xbf16>
    %c0_129 = arith.constant 0 : index
    %c256 = arith.constant 256 : index
    %246 = vector.load %arg33[%c0_129, %c256] : memref<16x512xbf16, #tpu.memory_space<vmem>>, vector<16x128xbf16>
    tpu.vector_store %arg33[%c0_129, %c256], %245 {strides = array<i32>} : memref<16x512xbf16, #tpu.memory_space<vmem>>, vector<16x128xbf16>,
    %cst_130 = arith.constant 0.000000e+00 : f32
    %247 = vector.broadcast %cst_130 : f32 to vector<16x120xf32>
    %248 = tpu.concatenate %107, %247 in 1 : vector<16x8xf32>, vector<16x120xf32> -> vector<16x128xf32>
    %249 = arith.truncf %248 : vector<16x128xf32> to vector<16x128xbf16>
    %c0_131 = arith.constant 0 : index
    %c384 = arith.constant 384 : index
    %250 = vector.load %arg33[%c0_131, %c384] : memref<16x512xbf16, #tpu.memory_space<vmem>>, vector<16x128xbf16>
    tpu.vector_store %arg33[%c0_131, %c384], %249 {strides = array<i32>} : memref<16x512xbf16, #tpu.memory_space<vmem>>, vector<16x128xbf16>,
    return
  }
}

module attributes {stable_mosaic.version = 11 : i64} {
  func.func @gnn_kernel(%arg0: i32, %arg1: i32, %arg2: i32, %arg3: memref<16x128xbf16, #tpu.memory_space<vmem>>, %arg4: memref<128x128xbf16, #tpu.memory_space<vmem>>, %arg5: memref<1x128x128xbf16, #tpu.memory_space<vmem>>, %arg6: memref<16x128xbf16, #tpu.memory_space<vmem>>, %arg7: memref<16x16xbf16, #tpu.memory_space<vmem>>, %arg8: memref<16x4xf32, #tpu.memory_space<vmem>>, %arg9: memref<16x128xf32, #tpu.memory_space<vmem>>, %arg10: memref<32x128xbf16, #tpu.memory_space<vmem>>) attributes {dimension_semantics = [#tpu.dimension_semantics<arbitrary>, #tpu.dimension_semantics<arbitrary>, #tpu.dimension_semantics<arbitrary>], iteration_bounds = array<i64: 5, 1, 1>, scalar_prefetch = 0 : i64, scratch_operands = 2 : i64, tpu.core_type = #tpu.core_type<tc>, window_params = [{pipeline_mode = #tpu.pipeline_mode<synchronous>, transform_indices = @transform_0, window_bounds = array<i64: 16, 128>}, {pipeline_mode = #tpu.pipeline_mode<synchronous>, transform_indices = @transform_1, window_bounds = array<i64: 128, 128>}, {transform_indices = @transform_2, window_bounds = array<i64: 1, 128, 128>}, {transform_indices = @transform_3, window_bounds = array<i64: 16, 128>}, {transform_indices = @transform_4, window_bounds = array<i64: 16, 16>}, {transform_indices = @transform_5, window_bounds = array<i64: 16, 4>}]} {
    %c2_i32 = arith.constant 2 : i32
    %0 = arith.remsi %arg0, %c2_i32 : i32
    %c16_i32 = arith.constant 16 : i32
    %1 = arith.muli %arg2, %c16_i32 : i32
    %2 = tpu.assume_multiple %1, 16 : i32
    %c16_i32_0 = arith.constant 16 : i32
    %3 = arith.muli %arg1, %c16_i32_0 : i32
    %4 = tpu.assume_multiple %3, 16 : i32
    %c0_i32 = arith.constant 0 : i32
    %5 = arith.cmpi eq, %arg0, %c0_i32 : i32
    %c0_i32_1 = arith.constant 0 : i32
    %6 = arith.cmpi eq, %arg1, %c0_i32_1 : i32
    %7 = arith.andi %5, %6 : i1
    %8 = arith.extui %7 : i1 to i32
    %c0_i32_2 = arith.constant 0 : i32
    %9 = arith.cmpi ne, %8, %c0_i32_2 : i32
    scf.if %9 {
      %26 = arith.index_cast %2 : i32 to index
      %c0_12 = arith.constant 0 : index
      %27 = vector.load %arg3[%26, %c0_12] : memref<16x128xbf16, #tpu.memory_space<vmem>>, vector<16x128xbf16>
      %c0_13 = arith.constant 0 : index
      %c0_14 = arith.constant 0 : index
      %28 = vector.load %arg4[%c0_13, %c0_14] : memref<128x128xbf16, #tpu.memory_space<vmem>>, vector<128x128xbf16>
      %cst_15 = arith.constant dense<0.000000e+00> : vector<16x128xf32>
      %29 = tpu.matmul %27, %28, %cst_15 {dimension_numbers = #tpu.dot_dimension_numbers<[1], [0], [0], [1], [0, 0, 1, 1], [], []>} : vector<16x128xbf16>, vector<128x128xbf16>, vector<16x128xf32> -> vector<16x128xf32>
      %30 = arith.truncf %29 : vector<16x128xf32> to vector<16x128xbf16>
      %31 = arith.index_cast %2 : i32 to index
      %c0_16 = arith.constant 0 : index
      %32 = vector.load %arg10[%31, %c0_16] : memref<32x128xbf16, #tpu.memory_space<vmem>>, vector<16x128xbf16>
      tpu.vector_store %arg10[%31, %c0_16], %30 {strides = array<i32>} : memref<32x128xbf16, #tpu.memory_space<vmem>>, vector<16x128xbf16>,
    } else {
    }
    %c16_i32_3 = arith.constant 16 : i32
    %10 = arith.muli %0, %c16_i32_3 : i32
    %11 = arith.addi %10, %2 : i32
    %12 = tpu.assume_multiple %11, 16 : i32
    %c0 = arith.constant 0 : index
    %c0_4 = arith.constant 0 : index
    %13 = vector.load %arg7[%c0, %c0_4] : memref<16x16xbf16, #tpu.memory_space<vmem>>, vector<16x16xbf16>
    %14 = arith.index_cast %12 : i32 to index
    %c0_5 = arith.constant 0 : index
    %15 = vector.load %arg10[%14, %c0_5] : memref<32x128xbf16, #tpu.memory_space<vmem>>, vector<16x128xbf16>
    %cst = arith.constant dense<0.000000e+00> : vector<16x128xf32>
    %16 = tpu.matmul %13, %15, %cst {dimension_numbers = #tpu.dot_dimension_numbers<[1], [0], [0], [1], [0, 0, 1, 1], [], []>} : vector<16x16xbf16>, vector<16x128xbf16>, vector<16x128xf32> -> vector<16x128xf32>
    %c0_i32_6 = arith.constant 0 : i32
    %17 = arith.cmpi eq, %arg2, %c0_i32_6 : i32
    %18 = arith.extui %17 : i1 to i32
    %c0_i32_7 = arith.constant 0 : i32
    %19 = arith.cmpi ne, %18, %c0_i32_7 : i32
    scf.if %19 {
      %c0_12 = arith.constant 0 : index
      %c0_13 = arith.constant 0 : index
      %26 = vector.load %arg9[%c0_12, %c0_13] : memref<16x128xf32, #tpu.memory_space<vmem>>, vector<16x128xf32>
      tpu.vector_store %arg9[%c0_12, %c0_13], %16 {strides = array<i32>} : memref<16x128xf32, #tpu.memory_space<vmem>>, vector<16x128xf32>,
    } else {
    }
    %c0_i32_8 = arith.constant 0 : i32
    %20 = arith.cmpi sgt, %arg2, %c0_i32_8 : i32
    %21 = arith.extui %20 : i1 to i32
    %c0_i32_9 = arith.constant 0 : i32
    %22 = arith.cmpi ne, %21, %c0_i32_9 : i32
    scf.if %22 {
      %c0_12 = arith.constant 0 : index
      %c0_13 = arith.constant 0 : index
      %26 = vector.load %arg9[%c0_12, %c0_13] : memref<16x128xf32, #tpu.memory_space<vmem>>, vector<16x128xf32>
      %27 = arith.addf %26, %16 : vector<16x128xf32>
      %c0_14 = arith.constant 0 : index
      %c0_15 = arith.constant 0 : index
      %28 = vector.load %arg9[%c0_14, %c0_15] : memref<16x128xf32, #tpu.memory_space<vmem>>, vector<16x128xf32>
      tpu.vector_store %arg9[%c0_14, %c0_15], %27 {strides = array<i32>} : memref<16x128xf32, #tpu.memory_space<vmem>>, vector<16x128xf32>,
    } else {
    }
    %c0_i32_10 = arith.constant 0 : i32
    %23 = arith.cmpi eq, %arg2, %c0_i32_10 : i32
    %24 = arith.extui %23 : i1 to i32
    %c0_i32_11 = arith.constant 0 : i32
    %25 = arith.cmpi ne, %24, %c0_i32_11 : i32
    scf.if %25 {
      %c0_12 = arith.constant 0 : index
      %c0_13 = arith.constant 0 : index
      %26 = vector.load %arg9[%c0_12, %c0_13] : memref<16x128xf32, #tpu.memory_space<vmem>>, vector<16x128xf32>
      %c4_i32 = arith.constant 4 : i32
      %27 = arith.cmpi slt, %arg0, %c4_i32 : i32
      %28 = arith.extui %27 : i1 to i32
      %c0_i32_14 = arith.constant 0 : i32
      %29 = arith.cmpi ne, %28, %c0_i32_14 : i32
      scf.if %29 {
        %cst_17 = arith.constant 0.000000e+00 : f32
        %33 = vector.broadcast %cst_17 : f32 to vector<16x128xf32>
        %34 = arith.maximumf %26, %33 : vector<16x128xf32>
        %c0_18 = arith.constant 0 : index
        %c0_19 = arith.constant 0 : index
        %35 = vector.load %arg6[%c0_18, %c0_19] : memref<16x128xbf16, #tpu.memory_space<vmem>>, vector<16x128xbf16>
        %36 = arith.extf %35 : vector<16x128xbf16> to vector<16x128xf32>
        %37 = arith.addf %34, %36 : vector<16x128xf32>
        %38 = arith.truncf %37 : vector<16x128xf32> to vector<16x128xbf16>
        %c0_20 = arith.constant 0 : index
        %c0_21 = arith.constant 0 : index
        %c0_22 = arith.constant 0 : index
        %39 = vector.load %arg5[%c0_20, %c0_21, %c0_22] : memref<1x128x128xbf16, #tpu.memory_space<vmem>>, vector<1x128x128xbf16>
        %40 = vector.shape_cast %39 : vector<1x128x128xbf16> to vector<128x128xbf16>
        %cst_23 = arith.constant dense<0.000000e+00> : vector<16x128xf32>
        %41 = tpu.matmul %38, %40, %cst_23 {dimension_numbers = #tpu.dot_dimension_numbers<[1], [0], [0], [1], [0, 0, 1, 1], [], []>} : vector<16x128xbf16>, vector<128x128xbf16>, vector<16x128xf32> -> vector<16x128xf32>
        %c1_i32 = arith.constant 1 : i32
        %42 = arith.subi %c1_i32, %0 : i32
        %c16_i32_24 = arith.constant 16 : i32
        %43 = arith.muli %42, %c16_i32_24 : i32
        %44 = arith.addi %43, %4 : i32
        %45 = tpu.assume_multiple %44, 16 : i32
        %46 = arith.truncf %41 : vector<16x128xf32> to vector<16x128xbf16>
        %47 = arith.index_cast %45 : i32 to index
        %c0_25 = arith.constant 0 : index
        %48 = vector.load %arg10[%47, %c0_25] : memref<32x128xbf16, #tpu.memory_space<vmem>>, vector<16x128xbf16>
        tpu.vector_store %arg10[%47, %c0_25], %46 {strides = array<i32>} : memref<32x128xbf16, #tpu.memory_space<vmem>>, vector<16x128xbf16>,
      } else {
      }
      %c4_i32_15 = arith.constant 4 : i32
      %30 = arith.cmpi eq, %arg0, %c4_i32_15 : i32
      %31 = arith.extui %30 : i1 to i32
      %c0_i32_16 = arith.constant 0 : i32
      %32 = arith.cmpi ne, %31, %c0_i32_16 : i32
      scf.if %32 {
        %33 = vector.extract_strided_slice %26 {offsets = [0, 0], sizes = [16, 4], strides = [1, 1]} : vector<16x128xf32> to vector<16x4xf32>
        %cst_17 = arith.constant dense<0xFF800000> : vector<16xf32>
        %34 = vector.multi_reduction <maximumf>, %33, %cst_17 [1] : vector<16x4xf32> to vector<16xf32>
        %35 = vector.shape_cast %34 : vector<16xf32> to vector<16x1xf32>
        %36 = vector.broadcast %35 : vector<16x1xf32> to vector<16x4xf32>
        %37 = arith.subf %33, %36 : vector<16x4xf32>
        %38 = math.exp %37 : vector<16x4xf32>
        %cst_18 = arith.constant dense<0.000000e+00> : vector<16xf32>
        %39 = vector.multi_reduction <add>, %38, %cst_18 [1] : vector<16x4xf32> to vector<16xf32>
        %40 = vector.shape_cast %39 : vector<16xf32> to vector<16x1xf32>
        %41 = vector.broadcast %40 : vector<16x1xf32> to vector<16x4xf32>
        %42 = arith.divf %38, %41 : vector<16x4xf32>
        %c0_19 = arith.constant 0 : index
        %c0_20 = arith.constant 0 : index
        %43 = vector.load %arg8[%c0_19, %c0_20] : memref<16x4xf32, #tpu.memory_space<vmem>>, vector<16x4xf32>
        tpu.vector_store %arg8[%c0_19, %c0_20], %42 {strides = array<i32>} : memref<16x4xf32, #tpu.memory_space<vmem>>, vector<16x4xf32>,
      } else {
      }
    } else {
    }
    return
  }
  func.func @transform_0(%arg0: i32, %arg1: i32, %arg2: i32) -> (i32, i32) {
    %c0_i32 = arith.constant 0 : i32
    %c0_i32_0 = arith.constant 0 : i32
    %c0_i32_1 = arith.constant 0 : i32
    return %c0_i32, %c0_i32_0 : i32, i32
  }
  func.func @transform_1(%arg0: i32, %arg1: i32, %arg2: i32) -> (i32, i32) {
    %c0_i32 = arith.constant 0 : i32
    %c0_i32_0 = arith.constant 0 : i32
    %c0_i32_1 = arith.constant 0 : i32
    return %c0_i32, %c0_i32_0 : i32, i32
  }
  func.func @transform_2(%arg0: i32, %arg1: i32, %arg2: i32) -> (i32, i32, i32) {
    %c3_i32 = arith.constant 3 : i32
    %0 = arith.minsi %arg0, %c3_i32 : i32
    %c0_i32 = arith.constant 0 : i32
    %c0_i32_0 = arith.constant 0 : i32
    %c0_i32_1 = arith.constant 0 : i32
    return %0, %c0_i32, %c0_i32_0 : i32, i32, i32
  }
  func.func @transform_3(%arg0: i32, %arg1: i32, %arg2: i32) -> (i32, i32) {
    %c3_i32 = arith.constant 3 : i32
    %0 = arith.minsi %arg0, %c3_i32 : i32
    %c0_i32 = arith.constant 0 : i32
    return %arg1, %0 : i32, i32
  }
  func.func @transform_4(%arg0: i32, %arg1: i32, %arg2: i32) -> (i32, i32) {
    %c0_i32 = arith.constant 0 : i32
    return %arg1, %arg2 : i32, i32
  }
  func.func @transform_5(%arg0: i32, %arg1: i32, %arg2: i32) -> (i32, i32) {
    %c0_i32 = arith.constant 0 : i32
    %c0_i32_0 = arith.constant 0 : i32
    return %arg1, %c0_i32 : i32, i32
  }
}

</mosaic_0001>

<llo_original>
// kernel: dgclm_forward.2
$region0: #{dgclm_forward.2}
  #allocation0 [shape = 'u32[]', space=smem, size = 0x4, offset = 0x4, fixed_abs, tag = 'smem constant byte address 0x4 - core index']
  #allocation1 [shape = 'u32[72,128]{1,0:T(1,128)}', space=vmem, size = 0x9000, scoped, tag = 'internal scratch']
  %s0 = inlined_call_operand.smem [shape: u32[34], index: -1, kind: input, shape index: {}]
  %s1 = sld [smem:[%s0]]
  %s2 = scalar_lea.smem %s0, 1
  %s3 = sld [smem:[%s2]]
  %s4 = scalar_lea.smem %s0, 2
  %s5 = sld [smem:[%s4]]
  %s6 = scalar_lea.smem %s0, 3
  %s7 = sld [smem:[%s6]]
  %s8 = scalar_lea.smem %s0, 4
  %s9 = sld [smem:[%s8]]
  %s10 = scalar_lea.smem %s0, 5
  %s11 = sld [smem:[%s10]]
  %s12 = scalar_lea.smem %s0, 6
  %s13 = sld [smem:[%s12]]
  %s14 = scalar_lea.smem %s0, 7
  %s15 = sld [smem:[%s14]]
  %s16 = scalar_lea.smem %s0, 8
  %s17 = sld [smem:[%s16]]
  %s18 = scalar_lea.smem %s0, 9
  %s19 = sld [smem:[%s18]]
  %s20 = scalar_lea.smem %s0, 10
  %s21 = sld [smem:[%s20]]
  %s22 = scalar_lea.smem %s0, 11
  %s23 = sld [smem:[%s22]]
  %s24 = scalar_lea.smem %s0, 12
  %s25 = sld [smem:[%s24]]
  %s26 = scalar_lea.smem %s0, 13
  %s27 = sld [smem:[%s26]]
  %s28 = scalar_lea.smem %s0, 14
  %s29 = sld [smem:[%s28]]
  %s30 = scalar_lea.smem %s0, 15
  %s31 = sld [smem:[%s30]]
  %s32 = scalar_lea.smem %s0, 16
  %s33 = sld [smem:[%s32]]
  %s34 = scalar_lea.smem %s0, 17
  %s35 = sld [smem:[%s34]]
  %s36 = scalar_lea.smem %s0, 18
  %s37 = sld [smem:[%s36]]
  %s38 = scalar_lea.smem %s0, 19
  %s39 = sld [smem:[%s38]]
  %s40 = scalar_lea.smem %s0, 20
  %s41 = sld [smem:[%s40]]
  %s42 = scalar_lea.smem %s0, 21
  %s43 = sld [smem:[%s42]]
  %s44 = scalar_lea.smem %s0, 22
  %s45 = sld [smem:[%s44]]
  %s46 = scalar_lea.smem %s0, 23
  %s47 = sld [smem:[%s46]]
  %s48 = scalar_lea.smem %s0, 24
  %s49 = sld [smem:[%s48]]
  %s50 = scalar_lea.smem %s0, 25
  %s51 = sld [smem:[%s50]]
  %s52 = scalar_lea.smem %s0, 26
  %s53 = sld [smem:[%s52]]
  %s54 = scalar_lea.smem %s0, 27
  %s55 = sld [smem:[%s54]]
  %s56 = scalar_lea.smem %s0, 28
  %s57 = sld [smem:[%s56]]
  %s58 = scalar_lea.smem %s0, 29
  %s59 = sld [smem:[%s58]]
  %s60 = scalar_lea.smem %s0, 30
  %s61 = sld [smem:[%s60]]
  %s62 = scalar_lea.smem %s0, 31
  %s63 = sld [smem:[%s62]]
  %s64 = scalar_lea.smem %s0, 32
  %s65 = sld [smem:[%s64]]
  %s66 = scalar_lea.smem %s0, 33
  %s67 = sld [smem:[%s66]]
  %68 = xla_tuple %s61, %s63, %s65, %s67
  %s69 = sld [smem:[#allocation0]]
  $region154: #{dgclm_forward.2} parent=0
    _
  %s71 = ssub.s32 1, %s69
  %s72 = scalar_select 0, %s71, %s69
  // Predicated region
  $region2: #{dgclm_forward.2} parent=0 // pred_check
    _
  $region3: #{dgclm_forward.2} parent=0 // pred_check_branch
    %74 = sbr.rel (0) target = $region5
  $region4: #{dgclm_forward.2} parent=0 // pred_region
    _
  $region5: #{dgclm_forward.2} parent=0 // pred_fallthru
    _
  // Predicated region
  $region6: #{dgclm_forward.2} parent=0 // pred_check
    _
  $region7: #{dgclm_forward.2} parent=0 // pred_check_branch
    %76 = sbr.rel (0) target = $region9
  $region8: #{dgclm_forward.2} parent=0 // pred_region
    _
  $region9: #{dgclm_forward.2} parent=0 // pred_fallthru
    _
  // Predicated region
  $region10: #{dgclm_forward.2} parent=0 // pred_check
    _
  $region11: #{dgclm_forward.2} parent=0 // pred_check_branch
    %78 = sbr.rel (0) target = $region13
  $region12: #{dgclm_forward.2} parent=0 // pred_region
    _
  $region13: #{dgclm_forward.2} parent=0 // pred_fallthru
    _
  // Predicated region
  $region14: #{dgclm_forward.2} parent=0 // pred_check
    _
  $region15: #{dgclm_forward.2} parent=0 // pred_check_branch
    %80 = sbr.rel (0) target = $region17
  $region16: #{dgclm_forward.2} parent=0 // pred_region
    _
  $region17: #{dgclm_forward.2} parent=0 // pred_fallthru
    _
  // Predicated region
  $region18: #{dgclm_forward.2} parent=0 // pred_check
    _
  $region19: #{dgclm_forward.2} parent=0 // pred_check_branch
    %82 = sbr.rel (0) target = $region21
  $region20: #{dgclm_forward.2} parent=0 // pred_region
    _
  $region21: #{dgclm_forward.2} parent=0 // pred_fallthru
    _
  // Predicated region
  $region22: #{dgclm_forward.2} parent=0 // pred_check
    _
  $region23: #{dgclm_forward.2} parent=0 // pred_check_branch
    %84 = sbr.rel (0) target = $region25
  $region24: #{dgclm_forward.2} parent=0 // pred_region
    _
  $region25: #{dgclm_forward.2} parent=0 // pred_fallthru
    _
  // Predicated region
  $region26: #{dgclm_forward.2} parent=0 // pred_check
    _
  $region27: #{dgclm_forward.2} parent=0 // pred_check_branch
    %86 = sbr.rel (0) target = $region29
  $region28: #{dgclm_forward.2} parent=0 // pred_region
    _
  $region29: #{dgclm_forward.2} parent=0 // pred_fallthru
    _
  // Predicated region
  $region30: #{dgclm_forward.2} parent=0 // pred_check
    _
  $region31: #{dgclm_forward.2} parent=0 // pred_check_branch
    %88 = sbr.rel (0) target = $region33
  $region32: #{dgclm_forward.2} parent=0 // pred_region
    _
  $region33: #{dgclm_forward.2} parent=0 // pred_fallthru
    _
  // Predicated region
  $region34: #{dgclm_forward.2} parent=0 // pred_check
    _
  $region35: #{dgclm_forward.2} parent=0 // pred_check_branch
    %90 = sbr.rel (0) target = $region37
  $region36: #{dgclm_forward.2} parent=0 // pred_region
    _
  $region37: #{dgclm_forward.2} parent=0 // pred_fallthru
    _
  // Predicated region
  $region38: #{dgclm_forward.2} parent=0 // pred_check
    _
  $region39: #{dgclm_forward.2} parent=0 // pred_check_branch
    %92 = sbr.rel (0) target = $region41
  $region40: #{dgclm_forward.2} parent=0 // pred_region
    _
  $region41: #{dgclm_forward.2} parent=0 // pred_fallthru
    _
  // Predicated region
  $region42: #{dgclm_forward.2} parent=0 // pred_check
    _
  $region43: #{dgclm_forward.2} parent=0 // pred_check_branch
    %94 = sbr.rel (0) target = $region45
  $region44: #{dgclm_forward.2} parent=0 // pred_region
    _
  $region45: #{dgclm_forward.2} parent=0 // pred_fallthru
    _
  // Predicated region
  $region46: #{dgclm_forward.2} parent=0 // pred_check
    _
  $region47: #{dgclm_forward.2} parent=0 // pred_check_branch
    %96 = sbr.rel (0) target = $region49
  $region48: #{dgclm_forward.2} parent=0 // pred_region
    _
  $region49: #{dgclm_forward.2} parent=0 // pred_fallthru
    _
  // Predicated region
  $region50: #{dgclm_forward.2} parent=0 // pred_check
    _
  $region51: #{dgclm_forward.2} parent=0 // pred_check_branch
    %98 = sbr.rel (0) target = $region53
  $region52: #{dgclm_forward.2} parent=0 // pred_region
    _
  $region53: #{dgclm_forward.2} parent=0 // pred_fallthru
    _
  // Predicated region
  $region54: #{dgclm_forward.2} parent=0 // pred_check
    _
  $region55: #{dgclm_forward.2} parent=0 // pred_check_branch
    %100 = sbr.rel (0) target = $region57
  $region56: #{dgclm_forward.2} parent=0 // pred_region
    _
  $region57: #{dgclm_forward.2} parent=0 // pred_fallthru
    _
  // Predicated region
  $region58: #{dgclm_forward.2} parent=0 // pred_check
    _
  $region59: #{dgclm_forward.2} parent=0 // pred_check_branch
    %102 = sbr.rel (0) target = $region61
  $region60: #{dgclm_forward.2} parent=0 // pred_region
    _
  $region61: #{dgclm_forward.2} parent=0 // pred_fallthru
    _
  // Predicated region
  $region62: #{dgclm_forward.2} parent=0 // pred_check
    _
  $region63: #{dgclm_forward.2} parent=0 // pred_check_branch
    %104 = sbr.rel (0) target = $region65
  $region64: #{dgclm_forward.2} parent=0 // pred_region
    _
  $region65: #{dgclm_forward.2} parent=0 // pred_fallthru
    _
  // Predicated region
  $region66: #{dgclm_forward.2} parent=0 // pred_check
    _
  $region67: #{dgclm_forward.2} parent=0 // pred_check_branch
    %106 = sbr.rel (0) target = $region69
  $region68: #{dgclm_forward.2} parent=0 // pred_region
    _
  $region69: #{dgclm_forward.2} parent=0 // pred_fallthru
    _
  // Predicated region
  $region70: #{dgclm_forward.2} parent=0 // pred_check
    _
  $region71: #{dgclm_forward.2} parent=0 // pred_check_branch
    %108 = sbr.rel (0) target = $region73
  $region72: #{dgclm_forward.2} parent=0 // pred_region
    _
  $region73: #{dgclm_forward.2} parent=0 // pred_fallthru
    _
  // Predicated region
  $region74: #{dgclm_forward.2} parent=0 // pred_check
    _
  $region75: #{dgclm_forward.2} parent=0 // pred_check_branch
    %110 = sbr.rel (0) target = $region77
  $region76: #{dgclm_forward.2} parent=0 // pred_region
    _
  $region77: #{dgclm_forward.2} parent=0 // pred_fallthru
    _
  // Predicated region
  $region78: #{dgclm_forward.2} parent=0 // pred_check
    _
  $region79: #{dgclm_forward.2} parent=0 // pred_check_branch
    %112 = sbr.rel (0) target = $region81
  $region80: #{dgclm_forward.2} parent=0 // pred_region
    _
  $region81: #{dgclm_forward.2} parent=0 // pred_fallthru
    _
  // Predicated region
  $region82: #{dgclm_forward.2} parent=0 // pred_check
    _
  $region83: #{dgclm_forward.2} parent=0 // pred_check_branch
    %114 = sbr.rel (0) target = $region85
  $region84: #{dgclm_forward.2} parent=0 // pred_region
    _
  $region85: #{dgclm_forward.2} parent=0 // pred_fallthru
    _
  // Predicated region
  $region86: #{dgclm_forward.2} parent=0 // pred_check
    _
  $region87: #{dgclm_forward.2} parent=0 // pred_check_branch
    %116 = sbr.rel (0) target = $region89
  $region88: #{dgclm_forward.2} parent=0 // pred_region
    _
  $region89: #{dgclm_forward.2} parent=0 // pred_fallthru
    _
  // Predicated region
  $region90: #{dgclm_forward.2} parent=0 // pred_check
    _
  $region91: #{dgclm_forward.2} parent=0 // pred_check_branch
    %118 = sbr.rel (0) target = $region93
  $region92: #{dgclm_forward.2} parent=0 // pred_region
    _
  $region93: #{dgclm_forward.2} parent=0 // pred_fallthru
    _
  // Predicated region
  $region94: #{dgclm_forward.2} parent=0 // pred_check
    _
  $region95: #{dgclm_forward.2} parent=0 // pred_check_branch
    %120 = sbr.rel (0) target = $region97
  $region96: #{dgclm_forward.2} parent=0 // pred_region
    _
  $region97: #{dgclm_forward.2} parent=0 // pred_fallthru
    _
  // Predicated region
  $region98: #{dgclm_forward.2} parent=0 // pred_check
    _
  $region99: #{dgclm_forward.2} parent=0 // pred_check_branch
    %122 = sbr.rel (0) target = $region101
  $region100: #{dgclm_forward.2} parent=0 // pred_region
    _
  $region101: #{dgclm_forward.2} parent=0 // pred_fallthru
    _
  // Predicated region
  $region102: #{dgclm_forward.2} parent=0 // pred_check
    _
  $region103: #{dgclm_forward.2} parent=0 // pred_check_branch
    %124 = sbr.rel (0) target = $region105
  $region104: #{dgclm_forward.2} parent=0 // pred_region
    _
  $region105: #{dgclm_forward.2} parent=0 // pred_fallthru
    _
  // Predicated region
  $region106: #{dgclm_forward.2} parent=0 // pred_check
    _
  $region107: #{dgclm_forward.2} parent=0 // pred_check_branch
    %126 = sbr.rel (0) target = $region109
  $region108: #{dgclm_forward.2} parent=0 // pred_region
    _
  $region109: #{dgclm_forward.2} parent=0 // pred_fallthru
    _
  // Predicated region
  $region110: #{dgclm_forward.2} parent=0 // pred_check
    _
  $region111: #{dgclm_forward.2} parent=0 // pred_check_branch
    %128 = sbr.rel (0) target = $region113
  $region112: #{dgclm_forward.2} parent=0 // pred_region
    _
  $region113: #{dgclm_forward.2} parent=0 // pred_fallthru
    _
  // Predicated region
  $region114: #{dgclm_forward.2} parent=0 // pred_check
    _
  $region115: #{dgclm_forward.2} parent=0 // pred_check_branch
    %130 = sbr.rel (0) target = $region117
  $region116: #{dgclm_forward.2} parent=0 // pred_region
    _
  $region117: #{dgclm_forward.2} parent=0 // pred_fallthru
    _
  // Predicated region
  $region118: #{dgclm_forward.2} parent=0 // pred_check
    _
  $region119: #{dgclm_forward.2} parent=0 // pred_check_branch
    %132 = sbr.rel (0) target = $region121
  $region120: #{dgclm_forward.2} parent=0 // pred_region
    _
  $region121: #{dgclm_forward.2} parent=0 // pred_fallthru
    _
  %v133 = vld [vmem:[%s1] sm:$0xff]
  %v134 = vld [vmem:[%s1 + $0x8] sm:$0xff]
  %137 = vrot.lane.b32.xlu0 %v133, 127
  %v138 = vpop.permute.xlu0 %137
  %139 = vrot.lane.b32.xlu0 %v134, 127
  %v140 = vpop.permute.xlu0 %139
  %141 = vrot.lane.b32.xlu0 %v133, 126
  %v142 = vpop.permute.xlu0 %141
  %143 = vrot.lane.b32.xlu0 %v134, 126
  %v144 = vpop.permute.xlu0 %143
  %v145 = vld [vmem:[%s3] sm:$0x1]
  %146 = vset.pattern.permute.xlu0 0
  %147 = vperm.xlu0 %146, %v133
  %v148 = vpop.permute.xlu0 %147
  %150 = vset.pattern.permute.xlu0 0
  %151 = vperm.xlu0 %150, %v134
  %v152 = vpop.permute.xlu0 %151
  %154 = vset.pattern.permute.xlu0 0
  %155 = vperm.xlu0 %154, %v138
  %v156 = vpop.permute.xlu0 %155
  %158 = vset.pattern.permute.xlu0 0
  %159 = vperm.xlu0 %158, %v140
  %v160 = vpop.permute.xlu0 %159
  %162 = vset.pattern.permute.xlu0 0
  %163 = vperm.xlu0 %162, %v142
  %v164 = vpop.permute.xlu0 %163
  %166 = vset.pattern.permute.xlu0 0
  %167 = vperm.xlu0 %166, %v144
  %v168 = vpop.permute.xlu0 %167
  %v171 = vperm.slane %v145, 0
  %v173 = vmul.f32 %v148, %v171
  %v174 = vmul.f32 %v152, %v171
  %v175 = vmul.f32 %v156, %v171
  %v176 = vmul.f32 %v160, %v171
  %v177 = vmul.f32 %v164, %v171
  %v178 = vmul.f32 %v168, %v171
  %v179 = vld [vmem:[%s5] sm:$0x1]
  %v181 = vperm.slane %v179, 0
  %v183 = vadd.f32 %v173, %v181
  %v184 = vadd.f32 %v174, %v181
  %v185 = vadd.f32 %v175, %v181
  %v186 = vadd.f32 %v176, %v181
  %v187 = vadd.f32 %v177, %v181
  %v188 = vadd.f32 %v178, %v181
  %v189 = vld [vmem:[%s7] sm:$0x1]
  %v190 = vld [vmem:[%s9] sm:$0x1]
  %vm191 = vcmask 31744
  %v192 = vsel %vm191, %v183, 0.0
  %v193 = vsel %vm191, %v184, 0.0
  %v194 = vadd.f32 %v192, %v193
  %v195 = vsel %vm191, %v185, 0.0
  %v196 = vadd.f32 %v194, %v195
  %v197 = vsel %vm191, %v186, 0.0
  %v198 = vadd.f32 %v196, %v197
  %v199 = vsel %vm191, %v187, 0.0
  %v200 = vadd.f32 %v198, %v199
  %v201 = vsel %vm191, %v188, 0.0
  %v202 = vadd.f32 %v200, %v201
  %v203 = vrot.slane %v202, 4
  %v204 = vadd.f32 %v202, %v203
  %v205 = vrot.slane %v204, 2
  %v206 = vadd.f32 %v204, %v205
  %v207 = vrot.slane %v206, 1
  %v208 = vadd.f32 %v206, %v207
  %v209 = vmul.f32 %v208, 0.020833334
  %v210 = vsub.f32 %v183, %v209
  %v211 = vsub.f32 %v184, %v209
  %v212 = vsub.f32 %v185, %v209
  %v213 = vsub.f32 %v186, %v209
  %v214 = vsub.f32 %v187, %v209
  %v215 = vsub.f32 %v188, %v209
  %v216 = vmul.f32 %v210, %v210
  %v217 = vmul.f32 %v211, %v211
  %v218 = vmul.f32 %v212, %v212
  %v219 = vmul.f32 %v213, %v213
  %v220 = vmul.f32 %v214, %v214
  %v221 = vmul.f32 %v215, %v215
  %v222 = vsel %vm191, %v216, 0.0
  %v223 = vsel %vm191, %v217, 0.0
  %v224 = vadd.f32 %v222, %v223
  %v225 = vsel %vm191, %v218, 0.0
  %v226 = vadd.f32 %v224, %v225
  %v227 = vsel %vm191, %v219, 0.0
  %v228 = vadd.f32 %v226, %v227
  %v229 = vsel %vm191, %v220, 0.0
  %v230 = vadd.f32 %v228, %v229
  %v231 = vsel %vm191, %v221, 0.0
  %v232 = vadd.f32 %v230, %v231
  %v233 = vrot.slane %v232, 4
  %v234 = vadd.f32 %v232, %v233
  %v235 = vrot.slane %v234, 2
  %v236 = vadd.f32 %v234, %v235
  %v237 = vrot.slane %v236, 1
  %v238 = vadd.f32 %v236, %v237
  %v239 = vmul.f32 %v238, 0.020833334
  %v240 = vadd.f32 %v239, 1e-05
  %v241 = vrsqrt.pop %v240
  %v242 = vmul.f32 %v241, %v240
  %v243 = vmul.f32 %v242, %v241
  %v244 = vmul.f32 0.5, %v243
  %v245 = vsub.f32 1.5, %v244
  %v246 = vmul.f32 %v241, %v245
  %vm247 = vweird.f32 %v240
  %vm248 = vweird.f32 %v241
  %vm249 = vmor %vm247, %vm248
  %v250 = vsel %vm249, %v241, %v246
  %v251 = vmul.f32 %v189, %v250
  %v253 = vperm.slane %v251, 0
  %v255 = vmul.f32 %v210, %v253
  %v256 = vmul.f32 %v211, %v253
  %v257 = vmul.f32 %v212, %v253
  %v258 = vmul.f32 %v213, %v253
  %v259 = vmul.f32 %v214, %v253
  %v260 = vmul.f32 %v215, %v253
  %v262 = vperm.slane %v190, 0
  %v264 = vadd.f32 %v255, %v262
  %v265 = vadd.f32 %v256, %v262
  %v266 = vadd.f32 %v257, %v262
  %v267 = vadd.f32 %v258, %v262
  %v268 = vadd.f32 %v259, %v262
  %v269 = vadd.f32 %v260, %v262
  %v270 = vmax.f32 %v264, 0.0
  %v271 = vmax.f32 %v265, 0.0
  %v272 = vmax.f32 %v266, 0.0
  %v273 = vmax.f32 %v267, 0.0
  %v274 = vmax.f32 %v268, 0.0
  %v275 = vmax.f32 %v269, 0.0
  %v276 = vld [vmem:[%s11] sm:$0xf]
  %v277 = vld [vmem:[%s13] sm:$0x1]
  %v279 = vperm.slane %v277, 0
  %v282 = vsel %vm191, %v270, 0
  %v285 = vsel %vm191, %v271, 0
  %v288 = vsel %vm191, %v272, 0
  %v291 = vsel %vm191, %v273, 0
  %v294 = vsel %vm191, %v274, 0
  %v297 = vsel %vm191, %v275, 0
  %vm299 = vcmask 1043456
  %v301 = vsel %vm299, %v276, 0
  %303 = vmatpush.msra.mxu0 0.0
  %304 = vmatpush.msra.mxu0 0.0
  %305 = vmatpush.msra.mxu0 0.0
  %306 = vmatpush.msra.mxu0 0.0
  %307 = vmatpush.msra.mxu0 0.0
  %308 = vmatpush.msra.mxu0 0.0
  %309 = vmatpush.msra.mxu0 0.0
  %310 = vmatpush.msra.mxu0 0.0
  %311 = vmatpush.msra.mxu0 0.0
  %312 = vmatpush.msra.mxu0 0.0
  %313 = vmatpush.msra.mxu0 0.0
  %314 = vmatpush.msra.mxu0 0.0
  %315 = vmatpush.msra.mxu0 0.0
  %316 = vmatpush.msra.mxu0 0.0
  %317 = vmatpush.msra.mxu0 0.0
  %318 = vmatpush.msra.mxu0 %v301
  %319 = vmatmul.f32.gmra.mxu0 %v282
  %v320 = vpop.f32.mrf.mxu0
  %v321 = vadd.f32 %v279, %v320
  %322 = vmatmul.f32.gmra.mxu0 %v285
  %v323 = vpop.f32.mrf.mxu0
  %v324 = vadd.f32 %v279, %v323
  %325 = vmatmul.f32.gmra.mxu0 %v288
  %v326 = vpop.f32.mrf.mxu0
  %v327 = vadd.f32 %v279, %v326
  %328 = vmatmul.f32.gmra.mxu0 %v291
  %v329 = vpop.f32.mrf.mxu0
  %v330 = vadd.f32 %v279, %v329
  %331 = vmatmul.f32.gmra.mxu0 %v294
  %v332 = vpop.f32.mrf.mxu0
  %v333 = vadd.f32 %v279, %v332
  %334 = vmatmul.f32.gmra.mxu0 %v297
  %v335 = vpop.f32.mrf.mxu0
  %v336 = vadd.f32 %v279, %v335
  %337 = vdwg.mxu0
  %v338 = vld [vmem:[%s15] sm:$0x1]
  %v339 = vld [vmem:[%s17] sm:$0x1]
  %vm340 = vcmask 64512
  %v341 = vsel %vm340, %v321, 0.0
  %v342 = vsel %vm340, %v324, 0.0
  %v343 = vadd.f32 %v341, %v342
  %v344 = vsel %vm340, %v327, 0.0
  %v345 = vadd.f32 %v343, %v344
  %v346 = vsel %vm340, %v330, 0.0
  %v347 = vadd.f32 %v345, %v346
  %v348 = vsel %vm340, %v333, 0.0
  %v349 = vadd.f32 %v347, %v348
  %v350 = vsel %vm340, %v336, 0.0
  %v351 = vadd.f32 %v349, %v350
  %v352 = vrot.slane %v351, 4
  %v353 = vadd.f32 %v351, %v352
  %v354 = vrot.slane %v353, 2
  %v355 = vadd.f32 %v353, %v354
  %v356 = vrot.slane %v355, 1
  %v357 = vadd.f32 %v355, %v356
  %v358 = vmul.f32 %v357, 0.020833334
  %v359 = vsub.f32 %v321, %v358
  %v360 = vsub.f32 %v324, %v358
  %v361 = vsub.f32 %v327, %v358
  %v362 = vsub.f32 %v330, %v358
  %v363 = vsub.f32 %v333, %v358
  %v364 = vsub.f32 %v336, %v358
  %v365 = vmul.f32 %v359, %v359
  %v366 = vmul.f32 %v360, %v360
  %v367 = vmul.f32 %v361, %v361
  %v368 = vmul.f32 %v362, %v362
  %v369 = vmul.f32 %v363, %v363
  %v370 = vmul.f32 %v364, %v364
  %v371 = vsel %vm340, %v365, 0.0
  %v372 = vsel %vm340, %v366, 0.0
  %v373 = vadd.f32 %v371, %v372
  %v374 = vsel %vm340, %v367, 0.0
  %v375 = vadd.f32 %v373, %v374
  %v376 = vsel %vm340, %v368, 0.0
  %v377 = vadd.f32 %v375, %v376
  %v378 = vsel %vm340, %v369, 0.0
  %v379 = vadd.f32 %v377, %v378
  %v380 = vsel %vm340, %v370, 0.0
  %v381 = vadd.f32 %v379, %v380
  %v382 = vrot.slane %v381, 4
  %v383 = vadd.f32 %v381, %v382
  %v384 = vrot.slane %v383, 2
  %v385 = vadd.f32 %v383, %v384
  %v386 = vrot.slane %v385, 1
  %v387 = vadd.f32 %v385, %v386
  %v388 = vmul.f32 %v387, 0.020833334
  %v389 = vadd.f32 %v388, 1e-05
  %v390 = vrsqrt.pop %v389
  %v391 = vmul.f32 %v390, %v389
  %v392 = vmul.f32 %v391, %v390
  %v393 = vmul.f32 0.5, %v392
  %v394 = vsub.f32 1.5, %v393
  %v395 = vmul.f32 %v390, %v394
  %vm396 = vweird.f32 %v389
  %vm397 = vweird.f32 %v390
  %vm398 = vmor %vm396, %vm397
  %v399 = vsel %vm398, %v390, %v395
  %v400 = vmul.f32 %v338, %v399
  %v402 = vperm.slane %v400, 0
  %v404 = vmul.f32 %v359, %v402
  %v405 = vmul.f32 %v360, %v402
  %v406 = vmul.f32 %v361, %v402
  %v407 = vmul.f32 %v362, %v402
  %v408 = vmul.f32 %v363, %v402
  %v409 = vmul.f32 %v364, %v402
  %v411 = vperm.slane %v339, 0
  %v413 = vadd.f32 %v404, %v411
  %v414 = vadd.f32 %v405, %v411
  %v415 = vadd.f32 %v406, %v411
  %v416 = vadd.f32 %v407, %v411
  %v417 = vadd.f32 %v408, %v411
  %v418 = vadd.f32 %v409, %v411
  %v419 = vmax.f32 %v413, 0.0
  %v420 = vmax.f32 %v414, 0.0
  %v421 = vmax.f32 %v415, 0.0
  %v422 = vmax.f32 %v416, 0.0
  %v423 = vmax.f32 %v417, 0.0
  %v424 = vmax.f32 %v418, 0.0
  %v425 = vld [vmem:[%s19] sm:$0xff]
  %v426 = vld [vmem:[%s21] sm:$0x1]
  %v428 = vperm.slane %v426, 0
  %v431 = vsel %vm340, %v419, 0
  %v434 = vsel %vm340, %v420, 0
  %v437 = vsel %vm340, %v421, 0
  %v440 = vsel %vm340, %v422, 0
  %v443 = vsel %vm340, %v423, 0
  %v446 = vsel %vm340, %v424, 0
  %448 = vmatpush.msra.mxu0 0.0
  %449 = vmatpush.msra.mxu0 0.0
  %450 = vmatpush.msra.mxu0 0.0
  %451 = vmatpush.msra.mxu0 0.0
  %452 = vmatpush.msra.mxu0 0.0
  %453 = vmatpush.msra.mxu0 0.0
  %454 = vmatpush.msra.mxu0 0.0
  %455 = vmatpush.msra.mxu0 0.0
  %456 = vmatpush.msra.mxu0 0.0
  %457 = vmatpush.msra.mxu0 0.0
  %458 = vmatpush.msra.mxu0 0.0
  %459 = vmatpush.msra.mxu0 0.0
  %460 = vmatpush.msra.mxu0 0.0
  %461 = vmatpush.msra.mxu0 0.0
  %462 = vmatpush.msra.mxu0 0.0
  %463 = vmatpush.msra.mxu0 %v425
  %464 = vmatmul.f32.gmra.mxu0 %v431
  %v465 = vpop.f32.mrf.mxu0
  %v466 = vadd.f32 %v428, %v465
  %467 = vmatmul.f32.gmra.mxu0 %v434
  %v468 = vpop.f32.mrf.mxu0
  %v469 = vadd.f32 %v428, %v468
  %470 = vmatmul.f32.gmra.mxu0 %v437
  %v471 = vpop.f32.mrf.mxu0
  %v472 = vadd.f32 %v428, %v471
  %473 = vmatmul.f32.gmra.mxu0 %v440
  %v474 = vpop.f32.mrf.mxu0
  %v475 = vadd.f32 %v428, %v474
  %476 = vmatmul.f32.gmra.mxu0 %v443
  %v477 = vpop.f32.mrf.mxu0
  %v478 = vadd.f32 %v428, %v477
  %479 = vmatmul.f32.gmra.mxu0 %v446
  %v480 = vpop.f32.mrf.mxu0
  %v481 = vadd.f32 %v428, %v480
  %482 = vdwg.mxu0
  %v483 = vld [vmem:[%s23] sm:$0x1]
  %v484 = vld [vmem:[%s25] sm:$0x1]
  %vm485 = vcmask 130048
  %v486 = vsel %vm485, %v466, 0.0
  %v487 = vsel %vm485, %v469, 0.0
  %v488 = vadd.f32 %v486, %v487
  %v489 = vsel %vm485, %v472, 0.0
  %v490 = vadd.f32 %v488, %v489
  %v491 = vsel %vm485, %v475, 0.0
  %v492 = vadd.f32 %v490, %v491
  %v493 = vsel %vm485, %v478, 0.0
  %v494 = vadd.f32 %v492, %v493
  %v495 = vsel %vm485, %v481, 0.0
  %v496 = vadd.f32 %v494, %v495
  %v497 = vrot.slane %v496, 4
  %v498 = vadd.f32 %v496, %v497
  %v499 = vrot.slane %v498, 2
  %v500 = vadd.f32 %v498, %v499
  %v501 = vrot.slane %v500, 1
  %v502 = vadd.f32 %v500, %v501
  %v503 = vmul.f32 %v502, 0.020833334
  %v504 = vsub.f32 %v466, %v503
  %v505 = vsub.f32 %v469, %v503
  %v506 = vsub.f32 %v472, %v503
  %v507 = vsub.f32 %v475, %v503
  %v508 = vsub.f32 %v478, %v503
  %v509 = vsub.f32 %v481, %v503
  %v510 = vmul.f32 %v504, %v504
  %v511 = vmul.f32 %v505, %v505
  %v512 = vmul.f32 %v506, %v506
  %v513 = vmul.f32 %v507, %v507
  %v514 = vmul.f32 %v508, %v508
  %v515 = vmul.f32 %v509, %v509
  %v516 = vsel %vm485, %v510, 0.0
  %v517 = vsel %vm485, %v511, 0.0
  %v518 = vadd.f32 %v516, %v517
  %v519 = vsel %vm485, %v512, 0.0
  %v520 = vadd.f32 %v518, %v519
  %v521 = vsel %vm485, %v513, 0.0
  %v522 = vadd.f32 %v520, %v521
  %v523 = vsel %vm485, %v514, 0.0
  %v524 = vadd.f32 %v522, %v523
  %v525 = vsel %vm485, %v515, 0.0
  %v526 = vadd.f32 %v524, %v525
  %v527 = vrot.slane %v526, 4
  %v528 = vadd.f32 %v526, %v527
  %v529 = vrot.slane %v528, 2
  %v530 = vadd.f32 %v528, %v529
  %v531 = vrot.slane %v530, 1
  %v532 = vadd.f32 %v530, %v531
  %v533 = vmul.f32 %v532, 0.020833334
  %v534 = vadd.f32 %v533, 1e-05
  %v535 = vrsqrt.pop %v534
  %v536 = vmul.f32 %v535, %v534
  %v537 = vmul.f32 %v536, %v535
  %v538 = vmul.f32 0.5, %v537
  %v539 = vsub.f32 1.5, %v538
  %v540 = vmul.f32 %v535, %v539
  %vm541 = vweird.f32 %v534
  %vm542 = vweird.f32 %v535
  %vm543 = vmor %vm541, %vm542
  %v544 = vsel %vm543, %v535, %v540
  %v545 = vmul.f32 %v483, %v544
  %v547 = vperm.slane %v545, 0
  %v549 = vmul.f32 %v504, %v547
  %v550 = vmul.f32 %v505, %v547
  %v551 = vmul.f32 %v506, %v547
  %v552 = vmul.f32 %v507, %v547
  %v553 = vmul.f32 %v508, %v547
  %v554 = vmul.f32 %v509, %v547
  %v556 = vperm.slane %v484, 0
  %v558 = vadd.f32 %v549, %v556
  %v559 = vadd.f32 %v550, %v556
  %v560 = vadd.f32 %v551, %v556
  %v561 = vadd.f32 %v552, %v556
  %v562 = vadd.f32 %v553, %v556
  %v563 = vadd.f32 %v554, %v556
  %v564 = vmax.f32 %v558, 0.0
  %v565 = vmax.f32 %v559, 0.0
  %v566 = vmax.f32 %v560, 0.0
  %v567 = vmax.f32 %v561, 0.0
  %v568 = vmax.f32 %v562, 0.0
  %v569 = vmax.f32 %v563, 0.0
  %v570 = vld [vmem:[%s29] sm:$0x1]
  %v571 = vld [vmem:[%s27] sm:$0xff]
  %v572 = vld [vmem:[%s27 + $0x8] sm:$0xff]
  %v574 = vsel %vm485, %v564, 0
  %v577 = vsel %vm485, %v565, 0
  %579 = vmatpush.msra.mxu0 0.0
  %580 = vmatpush.msra.mxu0 0.0
  %581 = vmatpush.msra.mxu0 0.0
  %582 = vmatpush.msra.mxu0 0.0
  %583 = vmatpush.msra.mxu0 0.0
  %584 = vmatpush.msra.mxu0 0.0
  %585 = vmatpush.msra.mxu0 0.0
  %586 = vmatpush.msra.mxu0 0.0
  %587 = vmatpush.msra.mxu0 0.0
  %588 = vmatpush.msra.mxu0 0.0
  %589 = vmatpush.msra.mxu0 0.0
  %590 = vmatpush.msra.mxu0 0.0
  %591 = vmatpush.msra.mxu0 0.0
  %592 = vmatpush.msra.mxu0 0.0
  %593 = vmatpush.msra.mxu0 %v572
  %594 = vmatpush.msra.mxu0 %v571
  %595 = vmatmul.f32.gmra.mxu0 %v574
  %v596 = vpop.f32.mrf.mxu0
  %v597 = vadd.f32 0.0, %v596
  %598 = vmatmul.f32.gmra.mxu0 %v577
  %v599 = vpop.f32.mrf.mxu0
  %v600 = vadd.f32 0.0, %v599
  %601 = vdwg.mxu0
  %v603 = vperm.slane %v570, 0
  %v605 = vadd.f32 %v603, %v597
  %v606 = vadd.f32 %v603, %v600
  %s607 = scalar_lea.vmem %s27, 16
  %v608 = vld [vmem:[%s607] sm:$0xff]
  %v609 = vld [vmem:[%s607 + $0x8] sm:$0xff]
  %v611 = vsel %vm485, %v566, 0
  %v614 = vsel %vm485, %v567, 0
  %616 = vmatpush.msra.mxu0 0.0
  %617 = vmatpush.msra.mxu0 0.0
  %618 = vmatpush.msra.mxu0 0.0
  %619 = vmatpush.msra.mxu0 0.0
  %620 = vmatpush.msra.mxu0 0.0
  %621 = vmatpush.msra.mxu0 0.0
  %622 = vmatpush.msra.mxu0 0.0
  %623 = vmatpush.msra.mxu0 0.0
  %624 = vmatpush.msra.mxu0 0.0
  %625 = vmatpush.msra.mxu0 0.0
  %626 = vmatpush.msra.mxu0 0.0
  %627 = vmatpush.msra.mxu0 0.0
  %628 = vmatpush.msra.mxu0 0.0
  %629 = vmatpush.msra.mxu0 0.0
  %630 = vmatpush.msra.mxu0 %v609
  %631 = vmatpush.msra.mxu0 %v608
  %632 = vmatmul.f32.gmra.mxu0 %v611
  %v633 = vpop.f32.mrf.mxu0
  %v634 = vadd.f32 0.0, %v633
  %635 = vmatmul.f32.gmra.mxu0 %v614
  %v636 = vpop.f32.mrf.mxu0
  %v637 = vadd.f32 0.0, %v636
  %638 = vdwg.mxu0
  %v639 = vadd.f32 %v605, %v634
  %v640 = vadd.f32 %v606, %v637
  %s641 = scalar_lea.vmem %s27, 32
  %v642 = vld [vmem:[%s641] sm:$0xff]
  %v643 = vld [vmem:[%s641 + $0x8] sm:$0xff]
  %v645 = vsel %vm485, %v568, 0
  %v648 = vsel %vm485, %v569, 0
  %650 = vmatpush.msra.mxu0 0.0
  %651 = vmatpush.msra.mxu0 0.0
  %652 = vmatpush.msra.mxu0 0.0
  %653 = vmatpush.msra.mxu0 0.0
  %654 = vmatpush.msra.mxu0 0.0
  %655 = vmatpush.msra.mxu0 0.0
  %656 = vmatpush.msra.mxu0 0.0
  %657 = vmatpush.msra.mxu0 0.0
  %658 = vmatpush.msra.mxu0 0.0
  %659 = vmatpush.msra.mxu0 0.0
  %660 = vmatpush.msra.mxu0 0.0
  %661 = vmatpush.msra.mxu0 0.0
  %662 = vmatpush.msra.mxu0 0.0
  %663 = vmatpush.msra.mxu0 0.0
  %664 = vmatpush.msra.mxu0 %v643
  %665 = vmatpush.msra.mxu0 %v642
  %666 = vmatmul.f32.gmra.mxu0 %v645
  %v667 = vpop.f32.mrf.mxu0
  %v668 = vadd.f32 0.0, %v667
  %669 = vmatmul.f32.gmra.mxu0 %v648
  %v670 = vpop.f32.mrf.mxu0
  %v671 = vadd.f32 0.0, %v670
  %672 = vdwg.mxu0
  %v673 = vadd.f32 %v639, %v668
  %v674 = vadd.f32 %v640, %v671
  %675 = vst.msk [vmem:[%s65] sm:$0xff] %vm340, %v673
  %676 = vst.msk [vmem:[%s65 + $0x8] sm:$0xff] %vm340, %v674
  %v677 = vld [vmem:[%s31] sm:$0xff]
  %v678 = vld [vmem:[%s33] sm:$0x1]
  %v680 = vperm.slane %v678, 0
  %v683 = vsel %vm340, %v673, 0
  %v686 = vsel %vm340, %v674, 0
  %688 = vmatpush.msra.mxu0 0.0
  %689 = vmatpush.msra.mxu0 0.0
  %690 = vmatpush.msra.mxu0 0.0
  %691 = vmatpush.msra.mxu0 0.0
  %692 = vmatpush.msra.mxu0 0.0
  %693 = vmatpush.msra.mxu0 0.0
  %694 = vmatpush.msra.mxu0 0.0
  %695 = vmatpush.msra.mxu0 0.0
  %696 = vmatpush.msra.mxu0 0.0
  %697 = vmatpush.msra.mxu0 0.0
  %698 = vmatpush.msra.mxu0 0.0
  %699 = vmatpush.msra.mxu0 0.0
  %700 = vmatpush.msra.mxu0 0.0
  %701 = vmatpush.msra.mxu0 0.0
  %702 = vmatpush.msra.mxu0 0.0
  %703 = vmatpush.msra.mxu0 %v677
  %704 = vmatmul.f32.gmra.mxu0 %v683
  %v705 = vpop.f32.mrf.mxu0
  %v706 = vadd.f32 %v680, %v705
  %707 = vmatmul.f32.gmra.mxu0 %v686
  %v708 = vpop.f32.mrf.mxu0
  %v709 = vadd.f32 %v680, %v708
  %710 = vdwg.mxu0
  %v711 = vld [vmem:[%s35] sm:$0x1]
  %v712 = vld [vmem:[%s37] sm:$0x1]
  %v713 = vsel %vm485, %v706, 0.0
  %v714 = vsel %vm485, %v709, 0.0
  %v715 = vadd.f32 %v713, %v714
  %v716 = vrot.slane %v715, 4
  %v717 = vadd.f32 %v715, %v716
  %v718 = vrot.slane %v717, 2
  %v719 = vadd.f32 %v717, %v718
  %v720 = vrot.slane %v719, 1
  %v721 = vadd.f32 %v719, %v720
  %v722 = vmul.f32 %v721, 0.0625
  %v723 = vsub.f32 %v706, %v722
  %v724 = vsub.f32 %v709, %v722
  %v725 = vmul.f32 %v723, %v723
  %v726 = vmul.f32 %v724, %v724
  %v727 = vsel %vm485, %v725, 0.0
  %v728 = vsel %vm485, %v726, 0.0
  %v729 = vadd.f32 %v727, %v728
  %v730 = vrot.slane %v729, 4
  %v731 = vadd.f32 %v729, %v730
  %v732 = vrot.slane %v731, 2
  %v733 = vadd.f32 %v731, %v732
  %v734 = vrot.slane %v733, 1
  %v735 = vadd.f32 %v733, %v734
  %v736 = vmul.f32 %v735, 0.0625
  %v737 = vadd.f32 %v736, 1e-05
  %v738 = vrsqrt.pop %v737
  %v739 = vmul.f32 %v738, %v737
  %v740 = vmul.f32 %v739, %v738
  %v741 = vmul.f32 0.5, %v740
  %v742 = vsub.f32 1.5, %v741
  %v743 = vmul.f32 %v738, %v742
  %vm744 = vweird.f32 %v737
  %vm745 = vweird.f32 %v738
  %vm746 = vmor %vm744, %vm745
  %v747 = vsel %vm746, %v738, %v743
  %v748 = vmul.f32 %v711, %v747
  %v750 = vperm.slane %v748, 0
  %v752 = vmul.f32 %v723, %v750
  %v753 = vmul.f32 %v724, %v750
  %v755 = vperm.slane %v712, 0
  %v757 = vadd.f32 %v752, %v755
  %v758 = vadd.f32 %v753, %v755
  %v759 = vmax.f32 %v757, 0.0
  %v760 = vmax.f32 %v758, 0.0
  %v761 = vld [vmem:[%s39] sm:$0xff]
  %v762 = vld [vmem:[%s39 + $0x8] sm:$0xff]
  %v763 = vld [vmem:[%s41] sm:$0x1]
  %v765 = vperm.slane %v763, 0
  %v768 = vsel %vm485, %v759, 0
  %v771 = vsel %vm485, %v760, 0
  %773 = vmatpush.msra.mxu0 0.0
  %774 = vmatpush.msra.mxu0 0.0
  %775 = vmatpush.msra.mxu0 0.0
  %776 = vmatpush.msra.mxu0 0.0
  %777 = vmatpush.msra.mxu0 0.0
  %778 = vmatpush.msra.mxu0 0.0
  %779 = vmatpush.msra.mxu0 0.0
  %780 = vmatpush.msra.mxu0 0.0
  %781 = vmatpush.msra.mxu0 0.0
  %782 = vmatpush.msra.mxu0 0.0
  %783 = vmatpush.msra.mxu0 0.0
  %784 = vmatpush.msra.mxu0 0.0
  %785 = vmatpush.msra.mxu0 0.0
  %786 = vmatpush.msra.mxu0 0.0
  %787 = vmatpush.msra.mxu0 %v762
  %788 = vmatpush.msra.mxu0 %v761
  %789 = vmatmul.f32.gmra.mxu0 %v768
  %v790 = vpop.f32.mrf.mxu0
  %v791 = vadd.f32 %v765, %v790
  %792 = vmatmul.f32.gmra.mxu0 %v771
  %v793 = vpop.f32.mrf.mxu0
  %v794 = vadd.f32 %v765, %v793
  %795 = vdwg.mxu0
  %v796 = vld [vmem:[%s43] sm:$0x1]
  %v797 = vld [vmem:[%s45] sm:$0x1]
  %v798 = vsel %vm340, %v791, 0.0
  %v799 = vsel %vm340, %v794, 0.0
  %v800 = vadd.f32 %v798, %v799
  %v801 = vrot.slane %v800, 4
  %v802 = vadd.f32 %v800, %v801
  %v803 = vrot.slane %v802, 2
  %v804 = vadd.f32 %v802, %v803
  %v805 = vrot.slane %v804, 1
  %v806 = vadd.f32 %v804, %v805
  %v807 = vmul.f32 %v806, 0.0625
  %v808 = vsub.f32 %v791, %v807
  %v809 = vsub.f32 %v794, %v807
  %v810 = vmul.f32 %v808, %v808
  %v811 = vmul.f32 %v809, %v809
  %v812 = vsel %vm340, %v810, 0.0
  %v813 = vsel %vm340, %v811, 0.0
  %v814 = vadd.f32 %v812, %v813
  %v815 = vrot.slane %v814, 4
  %v816 = vadd.f32 %v814, %v815
  %v817 = vrot.slane %v816, 2
  %v818 = vadd.f32 %v816, %v817
  %v819 = vrot.slane %v818, 1
  %v820 = vadd.f32 %v818, %v819
  %v821 = vmul.f32 %v820, 0.0625
  %v822 = vadd.f32 %v821, 1e-05
  %v823 = vrsqrt.pop %v822
  %v824 = vmul.f32 %v823, %v822
  %v825 = vmul.f32 %v824, %v823
  %v826 = vmul.f32 0.5, %v825
  %v827 = vsub.f32 1.5, %v826
  %v828 = vmul.f32 %v823, %v827
  %vm829 = vweird.f32 %v822
  %vm830 = vweird.f32 %v823
  %vm831 = vmor %vm829, %vm830
  %v832 = vsel %vm831, %v823, %v828
  %v833 = vmul.f32 %v796, %v832
  %v835 = vperm.slane %v833, 0
  %v837 = vmul.f32 %v808, %v835
  %v838 = vmul.f32 %v809, %v835
  %v840 = vperm.slane %v797, 0
  %v842 = vadd.f32 %v837, %v840
  %v843 = vadd.f32 %v838, %v840
  %v844 = vmax.f32 %v842, 0.0
  %v845 = vmax.f32 %v843, 0.0
  %v846 = vld [vmem:[%s47] sm:$0xff]
  %v847 = vld [vmem:[%s49] sm:$0x1]
  %v849 = vperm.slane %v847, 0
  %v852 = vsel %vm340, %v844, 0
  %v855 = vsel %vm340, %v845, 0
  %857 = vmatpush.msra.mxu0 0.0
  %858 = vmatpush.msra.mxu0 0.0
  %859 = vmatpush.msra.mxu0 0.0
  %860 = vmatpush.msra.mxu0 0.0
  %861 = vmatpush.msra.mxu0 0.0
  %862 = vmatpush.msra.mxu0 0.0
  %863 = vmatpush.msra.mxu0 0.0
  %864 = vmatpush.msra.mxu0 0.0
  %865 = vmatpush.msra.mxu0 0.0
  %866 = vmatpush.msra.mxu0 0.0
  %867 = vmatpush.msra.mxu0 0.0
  %868 = vmatpush.msra.mxu0 0.0
  %869 = vmatpush.msra.mxu0 0.0
  %870 = vmatpush.msra.mxu0 0.0
  %871 = vmatpush.msra.mxu0 0.0
  %872 = vmatpush.msra.mxu0 %v846
  %873 = vmatmul.f32.gmra.mxu0 %v852
  %v874 = vpop.f32.mrf.mxu0
  %v875 = vadd.f32 %v849, %v874
  %876 = vmatmul.f32.gmra.mxu0 %v855
  %v877 = vpop.f32.mrf.mxu0
  %v878 = vadd.f32 %v849, %v877
  %879 = vdwg.mxu0
  %v880 = vld [vmem:[%s51] sm:$0x1]
  %v881 = vld [vmem:[%s53] sm:$0x1]
  %v882 = vsel %vm191, %v875, 0.0
  %v883 = vsel %vm191, %v878, 0.0
  %v884 = vadd.f32 %v882, %v883
  %v885 = vrot.slane %v884, 4
  %v886 = vadd.f32 %v884, %v885
  %v887 = vrot.slane %v886, 2
  %v888 = vadd.f32 %v886, %v887
  %v889 = vrot.slane %v888, 1
  %v890 = vadd.f32 %v888, %v889
  %v891 = vmul.f32 %v890, 0.0625
  %v892 = vsub.f32 %v875, %v891
  %v893 = vsub.f32 %v878, %v891
  %v894 = vmul.f32 %v892, %v892
  %v895 = vmul.f32 %v893, %v893
  %v896 = vsel %vm191, %v894, 0.0
  %v897 = vsel %vm191, %v895, 0.0
  %v898 = vadd.f32 %v896, %v897
  %v899 = vrot.slane %v898, 4
  %v900 = vadd.f32 %v898, %v899
  %v901 = vrot.slane %v900, 2
  %v902 = vadd.f32 %v900, %v901
  %v903 = vrot.slane %v902, 1
  %v904 = vadd.f32 %v902, %v903
  %v905 = vmul.f32 %v904, 0.0625
  %v906 = vadd.f32 %v905, 1e-05
  %v907 = vrsqrt.pop %v906
  %v908 = vmul.f32 %v907, %v906
  %v909 = vmul.f32 %v908, %v907
  %v910 = vmul.f32 0.5, %v909
  %v911 = vsub.f32 1.5, %v910
  %v912 = vmul.f32 %v907, %v911
  %vm913 = vweird.f32 %v906
  %vm914 = vweird.f32 %v907
  %vm915 = vmor %vm913, %vm914
  %v916 = vsel %vm915, %v907, %v912
  %v917 = vmul.f32 %v880, %v916
  %v919 = vperm.slane %v917, 0
  %v921 = vmul.f32 %v892, %v919
  %v922 = vmul.f32 %v893, %v919
  %v924 = vperm.slane %v881, 0
  %v926 = vadd.f32 %v921, %v924
  %v927 = vadd.f32 %v922, %v924
  %v928 = vmax.f32 %v926, 0.0
  %v929 = vmax.f32 %v927, 0.0
  %v930 = vld [vmem:[%s55] sm:$0xf]
  %v931 = vld [vmem:[%s57] sm:$0x1]
  %v933 = vperm.slane %v931, 0
  %v936 = vsel %vm191, %v928, 0
  %v939 = vsel %vm191, %v929, 0
  %v942 = vsel %vm299, %v930, 0
  %944 = vmatpush.msra.mxu0 0.0
  %945 = vmatpush.msra.mxu0 0.0
  %946 = vmatpush.msra.mxu0 0.0
  %947 = vmatpush.msra.mxu0 0.0
  %948 = vmatpush.msra.mxu0 0.0
  %949 = vmatpush.msra.mxu0 0.0
  %950 = vmatpush.msra.mxu0 0.0
  %951 = vmatpush.msra.mxu0 0.0
  %952 = vmatpush.msra.mxu0 0.0
  %953 = vmatpush.msra.mxu0 0.0
  %954 = vmatpush.msra.mxu0 0.0
  %955 = vmatpush.msra.mxu0 0.0
  %956 = vmatpush.msra.mxu0 0.0
  %957 = vmatpush.msra.mxu0 0.0
  %958 = vmatpush.msra.mxu0 0.0
  %959 = vmatpush.msra.mxu0 %v942
  %960 = vmatmul.f32.gmra.mxu0 %v936
  %v961 = vpop.f32.mrf.mxu0
  %v962 = vadd.f32 %v933, %v961
  %963 = vmatmul.f32.gmra.mxu0 %v939
  %v964 = vpop.f32.mrf.mxu0
  %v965 = vadd.f32 %v933, %v964
  %966 = vdwg.mxu0
  %vm967 = vcmask 23552
  %968 = vst.msk [vmem:[%s61] sm:$0xff] %vm967, %v962
  %969 = vst.msk [vmem:[%s61 + $0x8] sm:$0xff] %vm967, %v965
  %v970 = vld [vmem:[%s59] sm:$0xff]
  %v971 = vmul.f32 %v673, %v673
  %v972 = vmul.f32 %v674, %v674
  %v973 = vsel %vm340, %v971, 0.0
  %974 = vadd.xlane.f32.xlu0 %v973
  %v975 = vpop.xlane.xlu0 %974
  %v976 = vsel %vm340, %v972, 0.0
  %977 = vadd.xlane.f32.xlu0 %v976
  %v978 = vpop.xlane.xlu0 %977
  %v979 = vmul.f32 %v970, %v970
  %v980 = vsel %vm191, %v979, 0.0
  %v981 = vrot.slane %v980, 4
  %v982 = vadd.f32 %v980, %v981
  %v983 = vrot.slane %v982, 2
  %v984 = vadd.f32 %v982, %v983
  %v985 = vrot.slane %v984, 1
  %v986 = vadd.f32 %v984, %v985
  %987 = vmatpush.msra.mxu0 0.0
  %988 = vmatpush.msra.mxu0 0.0
  %989 = vmatpush.msra.mxu0 0.0
  %990 = vmatpush.msra.mxu0 0.0
  %991 = vmatpush.msra.mxu0 0.0
  %992 = vmatpush.msra.mxu0 0.0
  %993 = vmatpush.msra.mxu0 0.0
  %994 = vmatpush.msra.mxu0 0.0
  %995 = vmatpush.msra.mxu0 0.0
  %996 = vmatpush.msra.mxu0 0.0
  %997 = vmatpush.msra.mxu0 0.0
  %998 = vmatpush.msra.mxu0 0.0
  %999 = vmatpush.msra.mxu0 0.0
  %1000 = vmatpush.msra.mxu0 0.0
  %1001 = vmatpush.msra.mxu0 0.0
  %1002 = vmatpush.msra.mxu0 %v970
  %1003 = vmatmul.f32.gmra.mxu0 %v683
  %v1004 = vpop.f32.mrf.mxu0
  %v1005 = vadd.f32 0.0, %v1004
  %1006 = vmatmul.f32.gmra.mxu0 %v686
  %v1007 = vpop.f32.mrf.mxu0
  %v1008 = vadd.f32 0.0, %v1007
  %1009 = vdwg.mxu0
  %v1010 = vadd.f32 %v975, %v986
  %v1011 = vadd.f32 %v978, %v986
  %v1012 = vmul.f32 %v1005, 2.0
  %v1013 = vmul.f32 %v1008, 2.0
  %v1014 = vsub.f32 %v1010, %v1012
  %v1015 = vsub.f32 %v1011, %v1013
  %v1016 = vmax.f32 %v1014, 0.0
  %v1017 = vmax.f32 %v1015, 0.0
  %v1018 = vadd.f32 %v1016, 1.0
  %v1019 = vadd.f32 %v1017, 1.0
  %v1020 = vrcp.pop %v1018
  %v1021 = vmul.f32 %v1018, %v1020
  %v1022 = vsub.f32 1.0, %v1021
  %v1023 = vmul.f32 %v1020, %v1022
  %v1024 = vadd.f32 %v1020, %v1023
  %vm1025 = vweird.f32 %v1018
  %vm1026 = vweird.f32 %v1020
  %vm1027 = vmor %vm1025, %vm1026
  %v1028 = vsel %vm1027, %v1020, %v1024
  %v1029 = vand.u32 2147483647, %v1018
  %vm1030 = vcmp.eq.f32.partialorder %v1029, 8.507059e+37
  %v1031 = vand.u32 %v1018, 2147483648
  %v1032 = vor.u32 1.1754944e-38, %v1031
  %v1033 = vsel %vm1030, %v1032, %v1028
  %v1034 = vmul.f32 1.0, %v1033
  %v1035 = vrcp.pop %v1019
  %v1036 = vmul.f32 %v1019, %v1035
  %v1037 = vsub.f32 1.0, %v1036
  %v1038 = vmul.f32 %v1035, %v1037
  %v1039 = vadd.f32 %v1035, %v1038
  %vm1040 = vweird.f32 %v1019
  %vm1041 = vweird.f32 %v1035
  %vm1042 = vmor %vm1040, %vm1041
  %v1043 = vsel %vm1042, %v1035, %v1039
  %v1044 = vand.u32 2147483647, %v1019
  %vm1045 = vcmp.eq.f32.partialorder %v1044, 8.507059e+37
  %v1046 = vand.u32 %v1019, 2147483648
  %v1047 = vor.u32 1.1754944e-38, %v1046
  %v1048 = vsel %vm1045, %v1047, %v1043
  %v1049 = vmul.f32 1.0, %v1048
  %v1050 = vsel %vm191, %v1034, 0.0
  %1051 = vadd.xlane.f32.xlu0 %v1050
  %v1052 = vpop.xlane.xlu0 %1051
  %v1053 = vsel %vm191, %v1049, 0.0
  %1054 = vadd.xlane.f32.xlu0 %v1053
  %v1055 = vpop.xlane.xlu0 %1054
  %v1056 = vrcp.pop %v1052
  %v1057 = vmul.f32 %v1052, %v1056
  %v1058 = vsub.f32 1.0, %v1057
  %v1059 = vmul.f32 %v1056, %v1058
  %v1060 = vadd.f32 %v1056, %v1059
  %vm1061 = vweird.f32 %v1052
  %vm1062 = vweird.f32 %v1056
  %vm1063 = vmor %vm1061, %vm1062
  %v1064 = vsel %vm1063, %v1056, %v1060
  %v1065 = vand.u32 2147483647, %v1052
  %vm1066 = vcmp.eq.f32.partialorder %v1065, 8.507059e+37
  %v1067 = vand.u32 %v1052, 2147483648
  %v1068 = vor.u32 1.1754944e-38, %v1067
  %v1069 = vsel %vm1066, %v1068, %v1064
  %v1070 = vmul.f32 %v1034, %v1069
  %v1071 = vrcp.pop %v1055
  %v1072 = vmul.f32 %v1055, %v1071
  %v1073 = vsub.f32 1.0, %v1072
  %v1074 = vmul.f32 %v1071, %v1073
  %v1075 = vadd.f32 %v1071, %v1074
  %vm1076 = vweird.f32 %v1055
  %vm1077 = vweird.f32 %v1071
  %vm1078 = vmor %vm1076, %vm1077
  %v1079 = vsel %vm1078, %v1071, %v1075
  %v1080 = vand.u32 2147483647, %v1055
  %vm1081 = vcmp.eq.f32.partialorder %v1080, 8.507059e+37
  %v1082 = vand.u32 %v1055, 2147483648
  %v1083 = vor.u32 1.1754944e-38, %v1082
  %v1084 = vsel %vm1081, %v1083, %v1079
  %v1085 = vmul.f32 %v1049, %v1084
  %1086 = vst.msk [vmem:[%s63] sm:$0xff] %vm191, %v1070
  %1087 = vst.msk [vmem:[%s63 + $0x8] sm:$0xff] %vm191, %v1085
  %1088 = vrot.lane.b32.xlu0 %v272, 4
  %v1089 = vpop.permute.xlu0 %1088
  %1090 = vrot.lane.b32.xlu0 %v273, 4
  %v1091 = vpop.permute.xlu0 %1090
  %1094 = vrot.lane.b32.xlu0 %v274, 8
  %v1095 = vpop.permute.xlu0 %1094
  %1096 = vrot.lane.b32.xlu0 %v275, 8
  %v1097 = vpop.permute.xlu0 %1096
  %v1100 = vsel %vm191, %v270, %v1089
  %v1101 = vsel %vm191, %v271, %v1091
  %v1102 = vsel %vm340, %v1100, %v1095
  %v1103 = vsel %vm340, %v1101, %v1097
  %vm1104 = vcmask 97280
  %v1105 = vsel %vm1104, %v1102, 0.0
  %v1106 = vsel %vm1104, %v1103, 0.0
  %v1107 = vpack.c.bf16 %v1105, %v1105
  %v1108 = vpack.c.bf16 %v1106, %v1106
  %1109 = vst [vmem:[%s67] sm:$0xf] %v1107
  %1110 = vst [vmem:[%s67 + $0x10] sm:$0xf] %v1108
  %1111 = vrot.lane.b32.xlu0 %v421, 8
  %v1112 = vpop.permute.xlu0 %1111
  %1113 = vrot.lane.b32.xlu0 %v422, 8
  %v1114 = vpop.permute.xlu0 %1113
  %1117 = vrot.lane.b32.xlu0 %v423, 16
  %v1118 = vpop.permute.xlu0 %1117
  %1119 = vrot.lane.b32.xlu0 %v424, 16
  %v1120 = vpop.permute.xlu0 %1119
  %v1123 = vsel %vm340, %v419, %v1112
  %v1124 = vsel %vm340, %v420, %v1114
  %v1125 = vsel %vm485, %v1123, %v1118
  %v1126 = vsel %vm485, %v1124, %v1120
  %vm1127 = vcmask 195584
  %v1128 = vsel %vm1127, %v1125, 0.0
  %v1129 = vsel %vm1127, %v1126, 0.0
  %v1130 = vpack.c.bf16 %v1128, %v1128
  %v1131 = vpack.c.bf16 %v1129, %v1129
  %1132 = vst [vmem:[%s67 + $0x4] sm:$0xf] %v1130
  %1133 = vst [vmem:[%s67 + $0x14] sm:$0xf] %v1131
  %1134 = vrot.lane.b32.xlu0 %v566, 16
  %v1135 = vpop.permute.xlu0 %1134
  %1136 = vrot.lane.b32.xlu0 %v567, 16
  %v1137 = vpop.permute.xlu0 %1136
  %1140 = vrot.lane.b32.xlu0 %v568, 32
  %v1141 = vpop.permute.xlu0 %1140
  %1142 = vrot.lane.b32.xlu0 %v569, 32
  %v1143 = vpop.permute.xlu0 %1142
  %v1146 = vsel %vm485, %v564, %v1135
  %v1147 = vsel %vm485, %v565, %v1137
  %vm1148 = vcmask 261120
  %v1149 = vsel %vm1148, %v1146, %v1141
  %v1150 = vsel %vm1148, %v1147, %v1143
  %vm1151 = vcmask 392192
  %v1152 = vsel %vm1151, %v1149, 0.0
  %v1153 = vsel %vm1151, %v1150, 0.0
  %v1154 = vpack.c.bf16 %v1152, %v1152
  %v1155 = vpack.c.bf16 %v1153, %v1153
  %1156 = vst [vmem:[%s67 + $0x8] sm:$0xf] %v1154
  %1157 = vst [vmem:[%s67 + $0x18] sm:$0xf] %v1155
  %v1158 = vsel %vm340, %v673, 0.0
  %v1159 = vsel %vm340, %v674, 0.0
  %v1160 = vpack.c.bf16 %v1158, %v1158
  %v1161 = vpack.c.bf16 %v1159, %v1159
  %1162 = vst [vmem:[%s67 + $0xc] sm:$0xf] %v1160
  %1163 = vst [vmem:[%s67 + $0x1c] sm:$0xf] %v1161
  // Predicated region
  $region122: #{dgclm_forward.2} parent=0 // pred_check
    _
  $region123: #{dgclm_forward.2} parent=0 // pred_check_branch
    %1165 = sbr.rel (0) target = $region125
  $region124: #{dgclm_forward.2} parent=0 // pred_region
    _
  $region125: #{dgclm_forward.2} parent=0 // pred_fallthru
    _
  // Predicated region
  $region126: #{dgclm_forward.2} parent=0 // pred_check
    _
  $region127: #{dgclm_forward.2} parent=0 // pred_check_branch
    %1167 = sbr.rel (0) target = $region129
  $region128: #{dgclm_forward.2} parent=0 // pred_region
    _
  $region129: #{dgclm_forward.2} parent=0 // pred_fallthru
    _
  // Predicated region
  $region130: #{dgclm_forward.2} parent=0 // pred_check
    _
  $region131: #{dgclm_forward.2} parent=0 // pred_check_branch
    %1169 = sbr.rel (0) target = $region133
  $region132: #{dgclm_forward.2} parent=0 // pred_region
    _
  $region133: #{dgclm_forward.2} parent=0 // pred_fallthru
    _
  // Predicated region
  $region134: #{dgclm_forward.2} parent=0 // pred_check
    _
  $region135: #{dgclm_forward.2} parent=0 // pred_check_branch
    %1171 = sbr.rel (0) target = $region137
  $region136: #{dgclm_forward.2} parent=0 // pred_region
    _
  $region137: #{dgclm_forward.2} parent=0 // pred_fallthru
    _
  // Predicated region
  $region138: #{dgclm_forward.2} parent=0 // pred_check
    _
  $region139: #{dgclm_forward.2} parent=0 // pred_check_branch
    %1173 = sbr.rel (0) target = $region141
  $region140: #{dgclm_forward.2} parent=0 // pred_region
    _
  $region141: #{dgclm_forward.2} parent=0 // pred_fallthru
    _
  // Predicated region
  $region142: #{dgclm_forward.2} parent=0 // pred_check
    _
  $region143: #{dgclm_forward.2} parent=0 // pred_check_branch
    %1175 = sbr.rel (0) target = $region145
  $region144: #{dgclm_forward.2} parent=0 // pred_region
    _
  $region145: #{dgclm_forward.2} parent=0 // pred_fallthru
    _
  // Predicated region
  $region146: #{dgclm_forward.2} parent=0 // pred_check
    _
  $region147: #{dgclm_forward.2} parent=0 // pred_check_branch
    %1177 = sbr.rel (0) target = $region149
  $region148: #{dgclm_forward.2} parent=0 // pred_region
    _
  $region149: #{dgclm_forward.2} parent=0 // pred_fallthru
    _
  // Predicated region
  $region150: #{dgclm_forward.2} parent=0 // pred_check
    _
  $region151: #{dgclm_forward.2} parent=0 // pred_check_branch
    %1179 = sbr.rel (0) target = $region153
  $region152: #{dgclm_forward.2} parent=0 // pred_region
    _
  $region153: #{dgclm_forward.2} parent=0 // pred_fallthru
    _

// kernel: dgclm_forward.3
$region0: #{dgclm_forward.3}
  #allocation0 [shape = 'u32[]', space=smem, size = 0x4, offset = 0x4, fixed_abs, tag = 'smem constant byte address 0x4 - core index']
  #allocation1 [shape = 'u32[72,128]{1,0:T(1,128)}', space=vmem, size = 0x9000, scoped, tag = 'internal scratch']
  #allocation2 [shape = 'f32[16,128]{1,0:T(8,128)}', space=vmem, size = 0x2000, scoped, tag = 'scratch operand']
  #allocation3 [shape = 'bf16[32,128]{1,0:T(8,128)(2,1)}', space=vmem, size = 0x2000, scoped, tag = 'scratch operand']
  %s0 = inlined_call_operand.vmem [shape: bf16[16,128], index: 0, kind: input, shape index: {}]
  %s1 = inlined_call_operand.vmem [shape: bf16[128,128], index: 1, kind: input, shape index: {}]
  %s2 = inlined_call_operand.vmem [shape: bf16[4,128,128], index: 2, kind: input, shape index: {}]
  %s3 = inlined_call_operand.vmem [shape: bf16[16,512], index: 3, kind: input, shape index: {}]
  %s4 = inlined_call_operand.vmem [shape: bf16[16,16], index: 4, kind: input, shape index: {}]
  %s5 = inlined_call_operand.vmem [shape: f32[16,4], index: 5, kind: output, shape index: {}]
  %s6 = sld [smem:[#allocation0]]
  $region118: #{dgclm_forward.3} parent=0
    _
  %s8 = ssub.s32 1, %s6
  %s9 = scalar_select 0, %s8, %s6
  $region1: #{dgclm_forward.3} parent=0
    #allocation4 [shape = 'u8[8192]{0}', space=vmem, size = 0x2000, scoped, tag = 'input window, operand 3']
    loop: start=0, step=1, limit=7
    $region2: #{dgclm_forward.3} parent=1 // loop_pre_header
      _
    $region3: #{dgclm_forward.3} parent=1 // loop_header
      %s11 = sphi 0, %s15
      %p12 = scmp.ge.s32.totalorder %s11, 7
      %s18 = sphi 0, %s37
      %s19 = sphi 0, %s33
      %s20 = sphi 0, %s29
      %s21 = sphi 0, %s18
      %s22 = sphi 0, %s19
      %s23 = sphi 0, %s20
      %s24 = sphi 0, %s21
      %s25 = sphi 0, %s22
      %s26 = sphi 0, %s23
      %s38 = sphi 0, %s38
      %s40 = sphi 0, %s38
      %s41 = sphi 0, %s40
      %s55 = sphi 0, %s41
      %s59 = sphi 0, %s59
      %s61 = sphi 0, %s59
      %s62 = sphi 0, %s61
      %s76 = sphi 0, %s62
      %s86 = sphi 0, %s88
      %s89 = sphi 0, %s86
      %s90 = sphi 0, %s89
      %s106 = sphi 0, %s90
      %s118 = sphi 0, %s120
      %s121 = sphi 0, %s118
      %s122 = sphi 0, %s121
      %s138 = sphi 0, %s122
      %s146 = sphi 0, %s148
      %s149 = sphi 0, %s146
      %s150 = sphi 0, %s149
      %s166 = sphi 0, %s150
      %s172 = sphi 0, %s174
      %s175 = sphi 0, %s172
      %s176 = sphi 0, %s175
      %s192 = sphi 0, %s176
    $region4: #{dgclm_forward.3} parent=1 // loop_header_branch
      %14 = sbr.rel (%p12) target = $region8
    $region5: #{dgclm_forward.3} parent=1 // loop_body
      %s16 = ssub.s32 %s11, 1
      %s17 = ssub.s32 %s11, 2
      %s27 = sadd.s32 1, %s20
      %p28 = scmp.ge.s32.totalorder %s27, 1
      %s29 = scalar_select %p28, 0, %s27
      %s30 = sadd.s32 1, %s19
      %s31 = scalar_select %p28, %s30, %s19
      %p32 = scmp.ge.s32.totalorder %s31, 1
      %s33 = scalar_select %p32, 0, %s31
      %s34 = sadd.s32 1, %s18
      %s35 = scalar_select %p32, %s34, %s18
      %p36 = scmp.ge.s32.totalorder %s35, 5
      %s37 = scalar_select %p36, 0, %s35
      %s39 = sadd.s32 %s38, 1
      %p42 = scmp.eq.s32.totalorder %s11, 4
      %p43 = scmp.ne.s32.totalorder %s38, %s40
      %p44 = scmp.eq.s32.totalorder %s11, 0
      %p45 = por %p43, %p44
      %p46 = scmp.ne.s32.totalorder %s38, %s40
      %p47 = scmp.eq.s32.totalorder %s16, 4
      %p48 = por %p46, %p47
      %p49 = scmp.ne.s32.totalorder %s40, %s41
      %p50 = scmp.eq.s32.totalorder %s16, 0
      %p51 = por %p49, %p50
      %p52 = scmp.ne.s32.totalorder %s40, %s41
      %p53 = scmp.eq.s32.totalorder %s17, 4
      %p54 = por %p52, %p53
      %p56 = scmp.ne.s32.totalorder %s41, %s55
      %p57 = scmp.eq.s32.totalorder %s17, 0
      %p58 = por %p56, %p57
      %s60 = sadd.s32 %s59, 1
      %p63 = scmp.eq.s32.totalorder %s11, 4
      %p64 = scmp.ne.s32.totalorder %s59, %s61
      %p65 = scmp.eq.s32.totalorder %s11, 0
      %p66 = por %p64, %p65
      %p67 = scmp.ne.s32.totalorder %s59, %s61
      %p68 = scmp.eq.s32.totalorder %s16, 4
      %p69 = por %p67, %p68
      %p70 = scmp.ne.s32.totalorder %s61, %s62
      %p71 = scmp.eq.s32.totalorder %s16, 0
      %p72 = por %p70, %p71
      %p73 = scmp.ne.s32.totalorder %s61, %s62
      %p74 = scmp.eq.s32.totalorder %s17, 4
      %p75 = por %p73, %p74
      %p77 = scmp.ne.s32.totalorder %s62, %s76
      %p78 = scmp.eq.s32.totalorder %s17, 0
      %p79 = por %p77, %p78
      %p80 = scmp.lt.s32.totalorder %s18, 3
      %s81 = scalar_select %p80, %s18, 3
      %p82 = scmp.lt.s32.totalorder %s37, 3
      %s83 = scalar_select %p82, %s37, 3
      %s84 = ssub.s32 %s81, %s83
      %p85 = scmp.eq.s32.totalorder %s84, 0
      %s87 = sadd.s32 %s86, 1
      %s88 = scalar_select %p85, %s86, %s87
      %p91 = pneg %p85
      %p92 = scmp.eq.s32.totalorder %s11, 4
      %p93 = por %p91, %p92
      %p94 = scmp.ne.s32.totalorder %s86, %s89
      %p95 = scmp.eq.s32.totalorder %s11, 0
      %p96 = por %p94, %p95
      %p97 = scmp.ne.s32.totalorder %s86, %s89
      %p98 = scmp.eq.s32.totalorder %s16, 4
      %p99 = por %p97, %p98
      %p100 = scmp.ne.s32.totalorder %s89, %s90
      %p101 = scmp.eq.s32.totalorder %s16, 0
      %p102 = por %p100, %p101
      %p103 = scmp.ne.s32.totalorder %s89, %s90
      %p104 = scmp.eq.s32.totalorder %s17, 4
      %p105 = por %p103, %p104
      %p107 = scmp.ne.s32.totalorder %s90, %s106
      %p108 = scmp.eq.s32.totalorder %s17, 0
      %p109 = por %p107, %p108
      %p110 = scmp.lt.s32.totalorder %s18, 3
      %s111 = scalar_select %p110, %s18, 3
      %p112 = scmp.lt.s32.totalorder %s37, 3
      %s113 = scalar_select %p112, %s37, 3
      %s114 = ssub.s32 %s19, %s33
      %s115 = ssub.s32 %s111, %s113
      %s116 = sor.u32 %s114, %s115
      %p117 = scmp.eq.s32.totalorder %s116, 0
      %s119 = sadd.s32 %s118, 1
      %s120 = scalar_select %p117, %s118, %s119
      %p123 = pneg %p117
      %p124 = scmp.eq.s32.totalorder %s11, 4
      %p125 = por %p123, %p124
      %p126 = scmp.ne.s32.totalorder %s118, %s121
      %p127 = scmp.eq.s32.totalorder %s11, 0
      %p128 = por %p126, %p127
      %p129 = scmp.ne.s32.totalorder %s118, %s121
      %p130 = scmp.eq.s32.totalorder %s16, 4
      %p131 = por %p129, %p130
      %p132 = scmp.ne.s32.totalorder %s121, %s122
      %p133 = scmp.eq.s32.totalorder %s16, 0
      %p134 = por %p132, %p133
      %p135 = scmp.ne.s32.totalorder %s121, %s122
      %p136 = scmp.eq.s32.totalorder %s17, 4
      %p137 = por %p135, %p136
      %p139 = scmp.ne.s32.totalorder %s122, %s138
      %p140 = scmp.eq.s32.totalorder %s17, 0
      %p141 = por %p139, %p140
      %s142 = ssub.s32 %s19, %s33
      %s143 = ssub.s32 %s20, %s29
      %s144 = sor.u32 %s142, %s143
      %p145 = scmp.eq.s32.totalorder %s144, 0
      %s147 = sadd.s32 %s146, 1
      %s148 = scalar_select %p145, %s146, %s147
      %p151 = pneg %p145
      %p152 = scmp.eq.s32.totalorder %s11, 4
      %p153 = por %p151, %p152
      %p154 = scmp.ne.s32.totalorder %s146, %s149
      %p155 = scmp.eq.s32.totalorder %s11, 0
      %p156 = por %p154, %p155
      %p157 = scmp.ne.s32.totalorder %s146, %s149
      %p158 = scmp.eq.s32.totalorder %s16, 4
      %p159 = por %p157, %p158
      %p160 = scmp.ne.s32.totalorder %s149, %s150
      %p161 = scmp.eq.s32.totalorder %s16, 0
      %p162 = por %p160, %p161
      %p163 = scmp.ne.s32.totalorder %s149, %s150
      %p164 = scmp.eq.s32.totalorder %s17, 4
      %p165 = por %p163, %p164
      %p167 = scmp.ne.s32.totalorder %s150, %s166
      %p168 = scmp.eq.s32.totalorder %s17, 0
      %p169 = por %p167, %p168
      %s170 = ssub.s32 %s19, %s33
      %p171 = scmp.eq.s32.totalorder %s170, 0
      %s173 = sadd.s32 %s172, 1
      %s174 = scalar_select %p171, %s172, %s173
      %p177 = pneg %p171
      %p178 = scmp.eq.s32.totalorder %s11, 4
      %p179 = por %p177, %p178
      %p180 = scmp.ne.s32.totalorder %s172, %s175
      %p181 = scmp.eq.s32.totalorder %s11, 0
      %p182 = por %p180, %p181
      %p183 = scmp.ne.s32.totalorder %s172, %s175
      %p184 = scmp.eq.s32.totalorder %s16, 4
      %p185 = por %p183, %p184
      %p186 = scmp.ne.s32.totalorder %s175, %s176
      %p187 = scmp.eq.s32.totalorder %s16, 0
      %p188 = por %p186, %p187
      %p189 = scmp.ne.s32.totalorder %s175, %s176
      %p190 = scmp.eq.s32.totalorder %s17, 4
      %p191 = por %p189, %p190
      %p193 = scmp.ne.s32.totalorder %s176, %s192
      %p194 = scmp.eq.s32.totalorder %s17, 0
      %p195 = por %p193, %p194
      %p196 = scmp.le.s32.totalorder 1, %s11
      %p197 = scmp.lt.s32.totalorder %s11, 6
      %p198 = pnand %p196, %p197
      %p199 = pneg %p198
      // Predicated region
      $region9: #{dgclm_forward.3} parent=5 // pred_check
        _
      $region10: #{dgclm_forward.3} parent=5 // pred_check_branch
        %201 = sbr.rel (%p198) target = $region12
      $region11: #{dgclm_forward.3} parent=5 // pred_region
        %s202 = ssub.s32 %s11, 1
        // Predicated region
        $region13: #{dgclm_forward.3} parent=11 // pred_check
          %p203 = pneg %p51
        $region14: #{dgclm_forward.3} parent=11 // pred_check_branch
          %205 = sbr.rel (%p203) target = $region16
        $region15: #{dgclm_forward.3} parent=11 // pred_region
          _
        $region16: #{dgclm_forward.3} parent=11 // pred_fallthru
          _
        // Predicated region
        $region17: #{dgclm_forward.3} parent=11 // pred_check
          %p206 = pneg %p72
        $region18: #{dgclm_forward.3} parent=11 // pred_check_branch
          %208 = sbr.rel (%p206) target = $region20
        $region19: #{dgclm_forward.3} parent=11 // pred_region
          _
        $region20: #{dgclm_forward.3} parent=11 // pred_fallthru
          _
        // Predicated region
        $region21: #{dgclm_forward.3} parent=11 // pred_check
          %p209 = pneg %p162
        $region22: #{dgclm_forward.3} parent=11 // pred_check_branch
          %211 = sbr.rel (%p209) target = $region24
        $region23: #{dgclm_forward.3} parent=11 // pred_region
          %s212 = smul.u32 2, %s22
          %p213 = scmp.lt.s32.totalorder %s212, 1
          %s214 = scalar_select %p213, %s212, 1
          %p215 = scmp.lt.s32.totalorder %s23, 0
          %s216 = scalar_select %p215, %s23, 0
          %s217 = sadd.s32 %s216, %s214
          %s218 = smul.addr %s217, 4
          %s219 = scalar_lea.vmem %s4, %s218
          %s220 = smul.u32 2, %s22
        $region24: #{dgclm_forward.3} parent=11 // pred_fallthru
          _
      $region12: #{dgclm_forward.3} parent=5 // pred_fallthru
        _
      %p221 = scmp.lt.s32.totalorder %s11, 5
      // Predicated region
      $region25: #{dgclm_forward.3} parent=5 // pred_check
        %p222 = pneg %p221
      $region26: #{dgclm_forward.3} parent=5 // pred_check_branch
        %224 = sbr.rel (%p222) target = $region28
      $region27: #{dgclm_forward.3} parent=5 // pred_region
        // Predicated region
        $region29: #{dgclm_forward.3} parent=27 // pred_check
          %p225 = pneg %p96
        $region30: #{dgclm_forward.3} parent=27 // pred_check_branch
          %227 = sbr.rel (%p225) target = $region32
        $region31: #{dgclm_forward.3} parent=27 // pred_region
          %p228 = scmp.lt.s32.totalorder %s18, 3
          %s229 = scalar_select %p228, %s18, 3
          %p230 = scmp.lt.s32.totalorder %s229, 3
          %s231 = scalar_select %p230, %s229, 3
          %s232 = smul.addr %s231, 16
          %s233 = smul.addr %s232, 4
          %s234 = scalar_lea.vmem %s2, %s233
          %p235 = scmp.lt.s32.totalorder %s18, 3
          %s236 = scalar_select %p235, %s18, 3
        $region32: #{dgclm_forward.3} parent=27 // pred_fallthru
          _
        // Predicated region
        $region33: #{dgclm_forward.3} parent=27 // pred_check
          %p237 = pneg %p128
        $region34: #{dgclm_forward.3} parent=27 // pred_check_branch
          %239 = sbr.rel (%p237) target = $region36
        $region35: #{dgclm_forward.3} parent=27 // pred_region
          %s240 = sand.u32 %s118, 1
          %s241 = sand.u32 %s118, 1
          %s242 = smul.addr %s241, 8
          %s243 = scalar_lea.vmem [#allocation4], %s242
          %p244 = scmp.lt.s32.totalorder %s18, 3
          %s245 = scalar_select %p244, %s18, 3
          %s246 = smul.u32 2, %s19
          %s247 = smul.addr %s246, 4
          %s248 = sadd.s32 %s245, %s247
          %s249 = smul.addr %s248, 4
          %s250 = scalar_lea.vmem %s3, %s249
          // Predicated region
          $region37: #{dgclm_forward.3} parent=35 // pred_check
            _
          $region38: #{dgclm_forward.3} parent=35 // pred_check_branch
            %252 = sbr.rel (0) target = $region40
          $region39: #{dgclm_forward.3} parent=35 // pred_region
            // Predicated region
            $region41: #{dgclm_forward.3} parent=39 // pred_check
              _
            $region42: #{dgclm_forward.3} parent=39 // pred_check_branch
              %254 = sbr.rel target = $region44
            $region43: #{dgclm_forward.3} parent=39 // pred_region
              // Predicated region
              $region56: #{dgclm_forward.3} parent=43 // pred_check
                _
              $region57: #{dgclm_forward.3} parent=43 // pred_check_branch
                %272 = sbr.rel (0) target = $region59
              $region58: #{dgclm_forward.3} parent=43 // pred_region
                loop: start=0, step=1, limit=1
                $region60: #{dgclm_forward.3} parent=58 // loop_pre_header
                  _
                $region61: #{dgclm_forward.3} parent=58 // loop_header
                  %s274 = sphi 0, %s278
                  %p275 = scmp.ge.s32.totalorder %s274, 1
                  %s279 = sphi %s250, %s250
                  %s280 = sphi %s243, %s243
                $region62: #{dgclm_forward.3} parent=58 // loop_header_branch
                  %277 = sbr.rel (%p275) target = $region66
                $region63: #{dgclm_forward.3} parent=58 // loop_body
                  _
                $region64: #{dgclm_forward.3} parent=58 // loop_footer
                  %s278 = sadd.s32 1, %s274
                $region65: #{dgclm_forward.3} parent=58 // loop_footer_branch
                  %273 = sbr.rel target = $region61
                $region66: #{dgclm_forward.3} parent=58 // loop_exit
                  _
                %s282 = ssub.s32 16, 1
                loop: start=0, step=1, limit=1
                $region67: #{dgclm_forward.3} parent=58 // loop_pre_header
                  _
                $region68: #{dgclm_forward.3} parent=58 // loop_header
                  %s284 = sphi 0, %s288
                  %p285 = scmp.ge.s32.totalorder %s284, 1
                  %s289 = sphi %s250, %s250
                  %s290 = sphi %s243, %s243
                $region69: #{dgclm_forward.3} parent=58 // loop_header_branch
                  %287 = sbr.rel (%p285) target = $region73
                $region70: #{dgclm_forward.3} parent=58 // loop_body
                  %v291 = vld [vmem:[%s289] sm:%s282]
                  %292 = vst [vmem:[%s290] sm:%s282] %v291
                  %v293 = vld [vmem:[%s289 + $0x10] sm:%s282]
                  %294 = vst [vmem:[%s290 + $0x4] sm:%s282] %v293
                $region71: #{dgclm_forward.3} parent=58 // loop_footer
                  %s288 = sadd.s32 1, %s284
                $region72: #{dgclm_forward.3} parent=58 // loop_footer_branch
                  %283 = sbr.rel target = $region68
                $region73: #{dgclm_forward.3} parent=58 // loop_exit
                  _
              $region59: #{dgclm_forward.3} parent=43 // pred_fallthru
                _
            $region44: #{dgclm_forward.3} parent=39 // pred_fallthru
              _
            // Predicated region
            $region45: #{dgclm_forward.3} parent=39 // pred_check
              _
            $region46: #{dgclm_forward.3} parent=39 // pred_check_branch
              %256 = sbr.rel (0) target = $region48
            $region47: #{dgclm_forward.3} parent=39 // pred_region
              %s258 = ssub.s32 16, 1
              loop: start=0, step=1, limit=1
              $region49: #{dgclm_forward.3} parent=47 // loop_pre_header
                _
              $region50: #{dgclm_forward.3} parent=47 // loop_header
                %s260 = sphi 0, %s264
                %p261 = scmp.ge.s32.totalorder %s260, 1
                %s265 = sphi %s250, %s250
                %s266 = sphi %s243, %s243
              $region51: #{dgclm_forward.3} parent=47 // loop_header_branch
                %263 = sbr.rel (%p261) target = $region55
              $region52: #{dgclm_forward.3} parent=47 // loop_body
                %v267 = vld [vmem:[%s265] sm:%s258]
                %268 = vst [vmem:[%s266] sm:%s258] %v267
                %v269 = vld [vmem:[%s265 + $0x10] sm:%s258]
                %270 = vst [vmem:[%s266 + $0x4] sm:%s258] %v269
              $region53: #{dgclm_forward.3} parent=47 // loop_footer
                %s264 = sadd.s32 1, %s260
              $region54: #{dgclm_forward.3} parent=47 // loop_footer_branch
                %259 = sbr.rel target = $region50
              $region55: #{dgclm_forward.3} parent=47 // loop_exit
                _
            $region48: #{dgclm_forward.3} parent=39 // pred_fallthru
              _
          $region40: #{dgclm_forward.3} parent=35 // pred_fallthru
            _
          %295 = vnop
        $region36: #{dgclm_forward.3} parent=27 // pred_fallthru
          _
      $region28: #{dgclm_forward.3} parent=5 // pred_fallthru
        _
      %p296 = scmp.le.s32.totalorder 1, %s11
      %p297 = scmp.lt.s32.totalorder %s11, 6
      %p298 = pnand %p296, %p297
      %p299 = pneg %p298
      // Predicated region
      $region74: #{dgclm_forward.3} parent=5 // pred_check
        _
      $region75: #{dgclm_forward.3} parent=5 // pred_check_branch
        %301 = sbr.rel (%p298) target = $region77
      $region76: #{dgclm_forward.3} parent=5 // pred_region
        %s302 = ssub.s32 %s11, 1
        %s303 = sand.u32 %s121, 1
        %s304 = sand.u32 %s121, 1
        %s305 = smul.addr %s304, 8
        %s306 = scalar_lea.vmem [#allocation4], %s305
        // Predicated region
        $region78: #{dgclm_forward.3} parent=76 // pred_check
          %p307 = pneg %p134
        $region79: #{dgclm_forward.3} parent=76 // pred_check_branch
          %309 = sbr.rel (%p307) target = $region81
        $region80: #{dgclm_forward.3} parent=76 // pred_region
          _
        $region81: #{dgclm_forward.3} parent=76 // pred_fallthru
          _
        %p310 = pneg %p51
        %p311 = pneg %p48
        %p312 = pneg %p72
        %p313 = pneg %p69
        %p314 = scmp.lt.s32.totalorder %s21, 3
        %s315 = scalar_select %p314, %s21, 3
        %p316 = scmp.lt.s32.totalorder %s315, 3
        %s317 = scalar_select %p316, %s315, 3
        %s318 = smul.addr %s317, 16
        %s319 = smul.addr %s318, 4
        %s320 = scalar_lea.vmem %s2, %s319
        %p321 = pneg %p102
        %p322 = pneg %p99
        %s323 = sand.u32 %s121, 1
        %s324 = sand.u32 %s121, 1
        %s325 = smul.addr %s324, 8
        %s326 = scalar_lea.vmem [#allocation4], %s325
        %p327 = pneg %p134
        %p328 = pneg %p131
        %s329 = smul.u32 2, %s22
        %p330 = scmp.lt.s32.totalorder %s329, 1
        %s331 = scalar_select %p330, %s329, 1
        %p332 = scmp.lt.s32.totalorder %s23, 0
        %s333 = scalar_select %p332, %s23, 0
        %s334 = sadd.s32 %s333, %s331
        %s335 = smul.addr %s334, 4
        %s336 = scalar_lea.vmem %s4, %s335
        %p337 = pneg %p162
        %p338 = pneg %p159
        %p339 = pneg %p188
        %p340 = pneg %p185
        %s341 = smul.u32 2, %s22
        %p342 = scmp.lt.s32.totalorder %s341, 1
        %s343 = scalar_select %p342, %s341, 1
        %s344 = smul.addr %s343, 8
        %s345 = scalar_lea.vmem %s5, %s344
        %p346 = scmp.lt.s32.totalorder %s21, 3
        %s347 = scalar_select %p346, %s21, 3
        %p348 = scmp.lt.s32.totalorder %s347, 3
        %s349 = scalar_select %p348, %s347, 3
        %s350 = smul.addr %s349, 16
        %s351 = smul.addr %s350, 4
        %s352 = scalar_lea.vmem %s2, %s351
        %p353 = scmp.lt.s32.totalorder %s21, 3
        %s354 = scalar_select %p353, %s21, 3
        %p355 = scmp.lt.s32.totalorder %s21, 3
        %s356 = scalar_select %p355, %s21, 3
        %s357 = smul.u32 2, %s22
        %s358 = smul.u32 2, %s22
        %p359 = scmp.lt.s32.totalorder %s358, 1
        %s360 = scalar_select %p359, %s358, 1
        %p361 = scmp.lt.s32.totalorder %s23, 0
        %s362 = scalar_select %p361, %s23, 0
        %s363 = sadd.s32 %s362, %s360
        %s364 = smul.addr %s363, 4
        %s365 = scalar_lea.vmem %s4, %s364
        %s366 = smul.u32 2, %s22
        %s367 = smul.u32 2, %s22
        %p368 = scmp.lt.s32.totalorder %s367, 1
        %s369 = scalar_select %p368, %s367, 1
        %s370 = smul.addr %s369, 8
        %s371 = scalar_lea.vmem %s5, %s370
        %s372 = smul.u32 2, %s22
        %p374 = scmp.lt.s32.totalorder %s21, 0
        %s375 = ssub.s32 0, %s21
        %s376 = scalar_select %p374, %s375, %s21
        %s377 = sand.u32 %s376, 1
        %s378 = ssub.s32 0, %s377
        %s379 = scalar_select %p374, %s378, %s377
        %s380 = smul.u32 %s23, 16
        %s381 = smul.u32 %s22, 16
        %p382 = scmp.eq.s32.totalorder %s21, 0
        %p383 = scmp.eq.s32.totalorder %s22, 0
        %p384 = pnand %p382, %p383
        %p385 = pneg %p384
        // Predicated region
        $region82: #{dgclm_forward.3} parent=76 // pred_check
          _
        $region83: #{dgclm_forward.3} parent=76 // pred_check_branch
          %387 = sbr.rel (%p384) target = $region85
        $region84: #{dgclm_forward.3} parent=76 // pred_region
          %s388 = sshra.s32 %s380, 3
          %s389 = sand.u32 %s380, 7
          %s390 = smul.addr %s388, 4
          %s391 = scalar_lea.vmem %s0, %s390
          %v392 = vld [vmem:[%s391] sm:$0xf]
          %v393 = vld [vmem:[%s391 + $0x4] sm:$0xf]
          %v394 = vld [vmem:[%s1] sm:$0xf]
          %v395 = vld [vmem:[%s1 + $0x4] sm:$0xf]
          %v396 = vld [vmem:[%s1 + $0x8] sm:$0xf]
          %v397 = vld [vmem:[%s1 + $0xc] sm:$0xf]
          %v398 = vld [vmem:[%s1 + $0x10] sm:$0xf]
          %v399 = vld [vmem:[%s1 + $0x14] sm:$0xf]
          %v400 = vld [vmem:[%s1 + $0x18] sm:$0xf]
          %v401 = vld [vmem:[%s1 + $0x1c] sm:$0xf]
          %v402 = vld [vmem:[%s1 + $0x20] sm:$0xf]
          %v403 = vld [vmem:[%s1 + $0x24] sm:$0xf]
          %v404 = vld [vmem:[%s1 + $0x28] sm:$0xf]
          %v405 = vld [vmem:[%s1 + $0x2c] sm:$0xf]
          %v406 = vld [vmem:[%s1 + $0x30] sm:$0xf]
          %v407 = vld [vmem:[%s1 + $0x34] sm:$0xf]
          %v408 = vld [vmem:[%s1 + $0x38] sm:$0xf]
          %v409 = vld [vmem:[%s1 + $0x3c] sm:$0xf]
          %v412 = vunpack.c.l.b16 %v392
          %v413 = vunpack.c.l.b16 %v393
          %v414 = vpack.c.b16 %v413, %v412
          %v432 = vunpack.c.l.b16 %v394
          %v433 = vunpack.c.l.b16 %v395
          %v434 = vunpack.c.l.b16 %v396
          %v435 = vunpack.c.l.b16 %v397
          %v436 = vunpack.c.l.b16 %v398
          %v437 = vunpack.c.l.b16 %v399
          %v438 = vunpack.c.l.b16 %v400
          %v439 = vunpack.c.l.b16 %v401
          %v440 = vunpack.c.l.b16 %v402
          %v441 = vunpack.c.l.b16 %v403
          %v442 = vunpack.c.l.b16 %v404
          %v443 = vunpack.c.l.b16 %v405
          %v444 = vunpack.c.l.b16 %v406
          %v445 = vunpack.c.l.b16 %v407
          %v446 = vunpack.c.l.b16 %v408
          %v447 = vunpack.c.l.b16 %v409
          %v448 = vpack.c.b16 %v433, %v432
          %v449 = vpack.c.b16 %v435, %v434
          %v450 = vpack.c.b16 %v437, %v436
          %v451 = vpack.c.b16 %v439, %v438
          %v452 = vpack.c.b16 %v441, %v440
          %v453 = vpack.c.b16 %v443, %v442
          %v454 = vpack.c.b16 %v445, %v444
          %v455 = vpack.c.b16 %v447, %v446
          %464 = vmatpush.bf16.msra.mxu0 %v455
          %465 = vmatpush.bf16.msra.mxu0 %v454
          %466 = vmatpush.bf16.msra.mxu0 %v453
          %467 = vmatpush.bf16.msra.mxu0 %v452
          %468 = vmatpush.bf16.msra.mxu0 %v451
          %469 = vmatpush.bf16.msra.mxu0 %v450
          %470 = vmatpush.bf16.msra.mxu0 %v449
          %471 = vmatpush.bf16.msra.mxu0 %v448
          %472 = vmatmul.bf16.gmra.mxu0 %v414
          %v473 = vpop.f32.mrf.mxu0
          %v474 = vadd.f32 0.0, %v473
          %v475 = vpop.f32.mrf.mxu0
          %v476 = vadd.f32 0.0, %v475
          %477 = vdwg.mxu0
          %v478 = vpack.c.bf16 %v474, %v474
          %v479 = vpack.c.bf16 %v476, %v476
          %s480 = smul.addr %s388, 4
          %s481 = scalar_lea.vmem [#allocation3], %s480
          %482 = vst [vmem:[%s481] sm:$0xf] %v478
          %483 = vst [vmem:[%s481 + $0x4] sm:$0xf] %v479
        $region85: #{dgclm_forward.3} parent=76 // pred_fallthru
          _
        %s484 = smul.u32 %s379, 16
        %s485 = sadd.s32 %s484, %s380
        %v486 = vld [vmem:[%s365] sm:$0xf]
        %v487 = vld [vmem:[%s365 + $0x4] sm:$0xf]
        %s488 = sshra.s32 %s485, 3
        %s489 = sand.u32 %s485, 7
        %s490 = smul.addr %s488, 4
        %s491 = scalar_lea.vmem [#allocation3], %s490
        %v492 = vld [vmem:[%s491] sm:$0xf]
        %v493 = vld [vmem:[%s491 + $0x4] sm:$0xf]
        %v496 = vunpack.c.l.b16 %v486
        %v497 = vunpack.c.l.b16 %v487
        %v498 = vpack.c.b16 %v497, %v496
        %v501 = vunpack.c.l.b16 %v492
        %v502 = vunpack.c.l.b16 %v493
        %v503 = vpack.c.b16 %v502, %v501
        %vm505 = vcmask 130048
        %v507 = vsel %vm505, %v498, 0
        %509 = vmatpush.bf16.msra.mxu0 0
        %510 = vmatpush.bf16.msra.mxu0 0
        %511 = vmatpush.bf16.msra.mxu0 0
        %512 = vmatpush.bf16.msra.mxu0 0
        %513 = vmatpush.bf16.msra.mxu0 0
        %514 = vmatpush.bf16.msra.mxu0 0
        %515 = vmatpush.bf16.msra.mxu0 0
        %516 = vmatpush.bf16.msra.mxu0 %v503
        %517 = vmatmul.bf16.gmra.mxu0 %v507
        %v518 = vpop.f32.mrf.mxu0
        %v519 = vadd.f32 0.0, %v518
        %v520 = vpop.f32.mrf.mxu0
        %v521 = vadd.f32 0.0, %v520
        %522 = vdwg.mxu0
        %p523 = scmp.eq.s32.totalorder %s23, 0
        // Predicated region
        $region86: #{dgclm_forward.3} parent=76 // pred_check
          %p524 = pneg %p523
        $region87: #{dgclm_forward.3} parent=76 // pred_check_branch
          %526 = sbr.rel (%p524) target = $region89
        $region88: #{dgclm_forward.3} parent=76 // pred_region
          %527 = vst [vmem:[#allocation2] sm:$0xff] %v519
          %528 = vst [vmem:[#allocation2 + $0x8] sm:$0xff] %v521
        $region89: #{dgclm_forward.3} parent=76 // pred_fallthru
          _
        %p529 = scmp.gt.s32.totalorder %s23, 0
        // Predicated region
        $region90: #{dgclm_forward.3} parent=76 // pred_check
          %p530 = pneg %p529
        $region91: #{dgclm_forward.3} parent=76 // pred_check_branch
          %532 = sbr.rel (%p530) target = $region93
        $region92: #{dgclm_forward.3} parent=76 // pred_region
          %v533 = vld [vmem:[#allocation2] sm:$0xff]
          %v534 = vld [vmem:[#allocation2 + $0x8] sm:$0xff]
          %v535 = vadd.f32 %v533, %v519
          %v536 = vadd.f32 %v534, %v521
          %537 = vst [vmem:[#allocation2] sm:$0xff] %v535
          %538 = vst [vmem:[#allocation2 + $0x8] sm:$0xff] %v536
        $region93: #{dgclm_forward.3} parent=76 // pred_fallthru
          _
        // Predicated region
        $region94: #{dgclm_forward.3} parent=76 // pred_check
          %p539 = pneg %p523
        $region95: #{dgclm_forward.3} parent=76 // pred_check_branch
          %541 = sbr.rel (%p539) target = $region97
        $region96: #{dgclm_forward.3} parent=76 // pred_region
          %v542 = vld [vmem:[#allocation2] sm:$0xff]
          %v543 = vld [vmem:[#allocation2 + $0x8] sm:$0xff]
          %p544 = scmp.lt.s32.totalorder %s21, 4
          // Predicated region
          $region98: #{dgclm_forward.3} parent=96 // pred_check
            %p545 = pneg %p544
          $region99: #{dgclm_forward.3} parent=96 // pred_check_branch
            %547 = sbr.rel (%p545) target = $region101
          $region100: #{dgclm_forward.3} parent=96 // pred_region
            %v548 = vmax.f32 %v542, 0.0
            %v549 = vmax.f32 %v543, 0.0
            %v550 = vld [vmem:[%s306] sm:$0xf]
            %v551 = vld [vmem:[%s306 + $0x4] sm:$0xf]
            %v552 = vunpack.c.l.bf16 %v550
            %v553 = vunpack.c.l.bf16 %v551
            %v554 = vadd.f32 %v548, %v552
            %v555 = vadd.f32 %v549, %v553
            %v556 = vpack.c.bf16 %v555, %v554
            %v557 = vld [vmem:[%s352] sm:$0xf]
            %v558 = vld [vmem:[%s352 + $0x4] sm:$0xf]
            %v559 = vld [vmem:[%s352 + $0x8] sm:$0xf]
            %v560 = vld [vmem:[%s352 + $0xc] sm:$0xf]
            %v561 = vld [vmem:[%s352 + $0x10] sm:$0xf]
            %v562 = vld [vmem:[%s352 + $0x14] sm:$0xf]
            %v563 = vld [vmem:[%s352 + $0x18] sm:$0xf]
            %v564 = vld [vmem:[%s352 + $0x1c] sm:$0xf]
            %v565 = vld [vmem:[%s352 + $0x20] sm:$0xf]
            %v566 = vld [vmem:[%s352 + $0x24] sm:$0xf]
            %v567 = vld [vmem:[%s352 + $0x28] sm:$0xf]
            %v568 = vld [vmem:[%s352 + $0x2c] sm:$0xf]
            %v569 = vld [vmem:[%s352 + $0x30] sm:$0xf]
            %v570 = vld [vmem:[%s352 + $0x34] sm:$0xf]
            %v571 = vld [vmem:[%s352 + $0x38] sm:$0xf]
            %v572 = vld [vmem:[%s352 + $0x3c] sm:$0xf]
            %v589 = vunpack.c.l.b16 %v557
            %v590 = vunpack.c.l.b16 %v558
            %v591 = vunpack.c.l.b16 %v559
            %v592 = vunpack.c.l.b16 %v560
            %v593 = vunpack.c.l.b16 %v561
            %v594 = vunpack.c.l.b16 %v562
            %v595 = vunpack.c.l.b16 %v563
            %v596 = vunpack.c.l.b16 %v564
            %v597 = vunpack.c.l.b16 %v565
            %v598 = vunpack.c.l.b16 %v566
            %v599 = vunpack.c.l.b16 %v567
            %v600 = vunpack.c.l.b16 %v568
            %v601 = vunpack.c.l.b16 %v569
            %v602 = vunpack.c.l.b16 %v570
            %v603 = vunpack.c.l.b16 %v571
            %v604 = vunpack.c.l.b16 %v572
            %v605 = vpack.c.b16 %v590, %v589
            %v606 = vpack.c.b16 %v592, %v591
            %v607 = vpack.c.b16 %v594, %v593
            %v608 = vpack.c.b16 %v596, %v595
            %v609 = vpack.c.b16 %v598, %v597
            %v610 = vpack.c.b16 %v600, %v599
            %v611 = vpack.c.b16 %v602, %v601
            %v612 = vpack.c.b16 %v604, %v603
            %621 = vmatpush.bf16.msra.mxu0 %v612
            %622 = vmatpush.bf16.msra.mxu0 %v611
            %623 = vmatpush.bf16.msra.mxu0 %v610
            %624 = vmatpush.bf16.msra.mxu0 %v609
            %625 = vmatpush.bf16.msra.mxu0 %v608
            %626 = vmatpush.bf16.msra.mxu0 %v607
            %627 = vmatpush.bf16.msra.mxu0 %v606
            %628 = vmatpush.bf16.msra.mxu0 %v605
            %629 = vmatmul.bf16.gmra.mxu0 %v556
            %v630 = vpop.f32.mrf.mxu0
            %v631 = vadd.f32 0.0, %v630
            %v632 = vpop.f32.mrf.mxu0
            %v633 = vadd.f32 0.0, %v632
            %634 = vdwg.mxu0
            %s635 = ssub.s32 1, %s379
            %s636 = smul.u32 %s635, 16
            %s637 = sadd.s32 %s636, %s381
            %v638 = vpack.c.bf16 %v631, %v631
            %v639 = vpack.c.bf16 %v633, %v633
            %s640 = sshra.s32 %s637, 3
            %s641 = sand.u32 %s637, 7
            %s642 = smul.addr %s640, 4
            %s643 = scalar_lea.vmem [#allocation3], %s642
            %644 = vst [vmem:[%s643] sm:$0xf] %v638
            %645 = vst [vmem:[%s643 + $0x4] sm:$0xf] %v639
          $region101: #{dgclm_forward.3} parent=96 // pred_fallthru
            _
          %p646 = scmp.eq.s32.totalorder %s21, 4
          // Predicated region
          $region102: #{dgclm_forward.3} parent=96 // pred_check
            %p647 = pneg %p646
          $region103: #{dgclm_forward.3} parent=96 // pred_check_branch
            %649 = sbr.rel (%p647) target = $region105
          $region104: #{dgclm_forward.3} parent=96 // pred_region
            %vm650 = vcmask 31744
            %v651 = vsel %vm650, %v542, -inf
            %652 = vmax.xlane.f32.xlu0 %v651
            %v653 = vpop.xlane.xlu0 %652
            %v654 = vsel %vm650, %v543, -inf
            %655 = vmax.xlane.f32.xlu0 %v654
            %v656 = vpop.xlane.xlu0 %655
            %v657 = vsub.f32 %v542, %v653
            %v658 = vsub.f32 %v543, %v656
            %v659 = vmul.f32 %v657, 1.442695
            %v660 = vpow.pop %v659
            %v661 = vmul.f32 %v658, 1.442695
            %v662 = vpow.pop %v661
            %v663 = vsel %vm650, %v660, 0.0
            %664 = vadd.xlane.f32.xlu0 %v663
            %v665 = vpop.xlane.xlu0 %664
            %v666 = vsel %vm650, %v662, 0.0
            %667 = vadd.xlane.f32.xlu0 %v666
            %v668 = vpop.xlane.xlu0 %667
            %v669 = vrcp.pop %v665
            %v670 = vmul.f32 %v665, %v669
            %v671 = vsub.f32 1.0, %v670
            %v672 = vmul.f32 %v669, %v671
            %v673 = vadd.f32 %v669, %v672
            %vm674 = vweird.f32 %v665
            %vm675 = vweird.f32 %v669
            %vm676 = vmor %vm674, %vm675
            %v677 = vsel %vm676, %v669, %v673
            %v678 = vand.u32 2147483647, %v665
            %vm679 = vcmp.eq.f32.partialorder %v678, 8.507059e+37
            %v680 = vand.u32 %v665, 2147483648
            %v681 = vor.u32 1.1754944e-38, %v680
            %v682 = vsel %vm679, %v681, %v677
            %v683 = vmul.f32 %v660, %v682
            %v684 = vrcp.pop %v668
            %v685 = vmul.f32 %v668, %v684
            %v686 = vsub.f32 1.0, %v685
            %v687 = vmul.f32 %v684, %v686
            %v688 = vadd.f32 %v684, %v687
            %vm689 = vweird.f32 %v668
            %vm690 = vweird.f32 %v684
            %vm691 = vmor %vm689, %vm690
            %v692 = vsel %vm691, %v684, %v688
            %v693 = vand.u32 2147483647, %v668
            %vm694 = vcmp.eq.f32.partialorder %v693, 8.507059e+37
            %v695 = vand.u32 %v668, 2147483648
            %v696 = vor.u32 1.1754944e-38, %v695
            %v697 = vsel %vm694, %v696, %v692
            %v698 = vmul.f32 %v662, %v697
            %699 = vst.msk [vmem:[%s371] sm:$0xff] %vm650, %v683
            %700 = vst.msk [vmem:[%s371 + $0x8] sm:$0xff] %vm650, %v698
          $region105: #{dgclm_forward.3} parent=96 // pred_fallthru
            _
        $region97: #{dgclm_forward.3} parent=76 // pred_fallthru
          _
        %s701 = smul.u32 2, %s22
        %p702 = scmp.lt.s32.totalorder %s701, 1
        %s703 = scalar_select %p702, %s701, 1
        %s704 = smul.addr %s703, 8
        %s705 = scalar_lea.vmem %s5, %s704
        // Predicated region
        $region106: #{dgclm_forward.3} parent=76 // pred_check
          %p706 = pneg %p185
        $region107: #{dgclm_forward.3} parent=76 // pred_check_branch
          %708 = sbr.rel (%p706) target = $region109
        $region108: #{dgclm_forward.3} parent=76 // pred_region
          %s709 = smul.u32 2, %s22
        $region109: #{dgclm_forward.3} parent=76 // pred_fallthru
          _
        // Predicated region
        $region110: #{dgclm_forward.3} parent=76 // pred_check
          %p710 = pneg %p185
        $region111: #{dgclm_forward.3} parent=76 // pred_check_branch
          %712 = sbr.rel (%p710) target = $region113
        $region112: #{dgclm_forward.3} parent=76 // pred_region
          %s713 = smul.u32 2, %s22
          %p714 = scmp.lt.s32.totalorder %s713, 1
          %s715 = scalar_select %p714, %s713, 1
          %s716 = smul.addr %s715, 8
          %s717 = scalar_lea.vmem %s5, %s716
        $region113: #{dgclm_forward.3} parent=76 // pred_fallthru
          _
      $region77: #{dgclm_forward.3} parent=5 // pred_fallthru
        _
      %p718 = scmp.le.s32.totalorder 2, %s11
      // Predicated region
      $region114: #{dgclm_forward.3} parent=5 // pred_check
        %p719 = pneg %p718
      $region115: #{dgclm_forward.3} parent=5 // pred_check_branch
        %721 = sbr.rel (%p719) target = $region117
      $region116: #{dgclm_forward.3} parent=5 // pred_region
        %s722 = ssub.s32 %s11, 2
      $region117: #{dgclm_forward.3} parent=5 // pred_fallthru
        _
    $region6: #{dgclm_forward.3} parent=1 // loop_footer
      %s15 = sadd.s32 1, %s11
    $region7: #{dgclm_forward.3} parent=1 // loop_footer_branch
      %10 = sbr.rel target = $region3
    $region8: #{dgclm_forward.3} parent=1 // loop_exit
      _

</llo_original>
